<compile_context>
chip_gen: v7x
topology: tpu7x:2x2x1
jax: 0.10.0
libtpu: 0.0.40
codegen_flags: <defaults>
</compile_context>

<pallas_src>
import numpy as np
import jax
import jax.numpy as jnp
from jax.experimental import pallas as pl
from jax.experimental.pallas import tpu as pltpu


def _round_up(x, m):
    return ((x + m - 1) // m) * m


# --------------------------------------------------------------------------
# One-time host-side weight packing (pure numpy; never runs inside jit).
# --------------------------------------------------------------------------
def _conv_to_dense_np(w_oihw, h_in, w_in):
    """Fold a valid KxK conv into a dense matrix D such that x_flat @ D equals
    the conv, with position-major / channel-minor flattening on both sides:
    input index ((i*w_in + j)*ci + c), output ((i*w_out + j)*co + o)."""
    w = np.asarray(w_oihw, np.float32)
    co, ci, kh, kw = w.shape
    h_out, w_out = h_in - kh + 1, w_in - kw + 1
    dense = np.zeros((ci * h_in * w_in, co * h_out * w_out), np.float32)
    for i2 in range(h_out):
        for j2 in range(w_out):
            for o in range(co):
                q = (i2 * w_out + j2) * co + o
                for c in range(ci):
                    for ki in range(kh):
                        for kj in range(kw):
                            p = ((i2 + ki) * w_in + (j2 + kj)) * ci + c
                            dense[p, q] = w[o, c, ki, kj]
    return dense


def pack_params(params):
    """Host-side repacking of PyTorch-layout params into kernel layout.
    Call once; pass the result to sim2net_forward on every call."""
    # conv1: (81, 441) dense, K zero-padded to 128 so the kernel consumes the
    # lane-padded (N, 128) input directly.
    w1d = _conv_to_dense_np(params["conv1_w"], 9, 9)          # (81, 441)
    w1d = np.pad(w1d, ((0, 128 - 81), (0, 0)))                # (128, 441)
    b1 = np.tile(np.asarray(params["conv1_b"], np.float32), 49).reshape(1, 441)

    w2d = _conv_to_dense_np(params["conv2_w"], 7, 7)          # (441, 450)
    b2 = np.tile(np.asarray(params["conv2_b"], np.float32), 25).reshape(1, 450)

    # PyTorch fc1 columns are NCHW-flattened (c*25 + h*5 + w); permute to the
    # kernel's position-major / channel-minor (h*5 + w)*18 + c ordering.
    fc1w = (np.asarray(params["fc1_w"], np.float32)
            .reshape(50, 18, 5, 5).transpose(2, 3, 1, 0).reshape(450, 50))
    fc1b = np.asarray(params["fc1_b"], np.float32).reshape(1, 50)

    fc2w = np.asarray(params["fc2_w"], np.float32).T          # (50, 2)
    fc2b = np.asarray(params["fc2_b"], np.float32).reshape(1, 2)

    return {
        "w1d": jnp.asarray(w1d, jnp.bfloat16),
        "b1": jnp.asarray(b1, jnp.float32),
        "w2d": jnp.asarray(w2d, jnp.bfloat16),
        "b2": jnp.asarray(b2, jnp.float32),
        "fc1w": jnp.asarray(fc1w, jnp.bfloat16),
        "fc1b": jnp.asarray(fc1b, jnp.float32),
        "fc2w": jnp.asarray(fc2w, jnp.bfloat16),
        "fc2b": jnp.asarray(fc2b, jnp.float32),
    }


# --------------------------------------------------------------------------
# Kernel
# --------------------------------------------------------------------------
def sim2net_kernel(x_ref, w1_ref, b1_ref, w2_ref, b2_ref,
                   fc1w_ref, fc1b_ref, fc2w_ref, fc2b_ref, out_ref):
    # conv1 (as dense matmul) + bias + ReLU.  bf16 operands, f32 accumulate.
    x = x_ref[...]                                                # (TN, 128) bf16
    h1 = jnp.dot(x, w1_ref[...], preferred_element_type=jnp.float32)
    h1 = jnp.maximum(h1 + b1_ref[...], 0.0).astype(jnp.bfloat16)  # (TN, 441)

    # conv2 (as dense matmul) + bias + ReLU.
    # TODO(synk): Dropout2d / F.dropout are identity here (eval-mode forward);
    # training-mode stochastic masks are not implemented.
    h2 = jnp.dot(h1, w2_ref[...], preferred_element_type=jnp.float32)
    h2 = jnp.maximum(h2 + b2_ref[...], 0.0).astype(jnp.bfloat16)  # (TN, 450)

    # fc1: single K=450 matmul + bias + ReLU.
    h3 = jnp.dot(h2, fc1w_ref[...], preferred_element_type=jnp.float32)
    h3 = jnp.maximum(h3 + fc1b_ref[...], 0.0).astype(jnp.bfloat16)  # (TN, 50)

    # fc2 + heads: sigmoid on column 0, identity on column 1, one store.
    out = jnp.dot(h3, fc2w_ref[...], preferred_element_type=jnp.float32)
    out = out + fc2b_ref[...]                                     # (TN, 2)
    col = jax.lax.broadcasted_iota(jnp.int32, out.shape, 1)
    out_ref[...] = jnp.where(col == 0, jax.nn.sigmoid(out), out)


# --------------------------------------------------------------------------
# Wrapper
# --------------------------------------------------------------------------
def _choose_tile(n, batch_tile):
    # Aim for >= 2 grid steps (v7x has 2 TensorCores; "parallel" semantics
    # shard the grid across them).  Everything rounded to the 8-row sublane.
    half = _round_up(max((n + 1) // 2, 1), 8)
    tn = max(8, min(_round_up(batch_tile, 8), half))
    n_pad = _round_up(n, tn)
    return tn, n_pad


def sim2net_forward(x_nchw, packed, *, batch_tile=1024):
    n = x_nchw.shape[0]
    tn, n_pad = _choose_tile(n, batch_tile)

    # (N, 1, 9, 9) -> contiguous bf16 (n_pad, 128): 81 data cols + zero pad.
    x = x_nchw.reshape(n, 81).astype(jnp.bfloat16)
    x = jnp.pad(x, ((0, n_pad - n), (0, 128 - 81)))

    grid = (n_pad // tn,)

    def resident(a):
        return pl.BlockSpec(a.shape, lambda i: (0, 0))

    out = pl.pallas_call(
        sim2net_kernel,
        out_shape=jax.ShapeDtypeStruct((n_pad, 2), jnp.float32),
        grid=grid,
        in_specs=[pl.BlockSpec((tn, 128), lambda i: (i, 0)),
                  resident(packed["w1d"]), resident(packed["b1"]),
                  resident(packed["w2d"]), resident(packed["b2"]),
                  resident(packed["fc1w"]), resident(packed["fc1b"]),
                  resident(packed["fc2w"]), resident(packed["fc2b"])],
        out_specs=pl.BlockSpec((tn, 2), lambda i: (i, 0)),
        compiler_params=pltpu.CompilerParams(
            dimension_semantics=("parallel",),
            vmem_limit_bytes=32 * 1024 * 1024),
    )(x, packed["w1d"], packed["b1"], packed["w2d"], packed["b2"],
      packed["fc1w"], packed["fc1b"], packed["fc2w"], packed["fc2b"])

    out = out[:n]
    return out[:, 0:1], out[:, 1:2]


# --------------------------------------------------------------------------
# Reference + test harness
# --------------------------------------------------------------------------
def init_params(key):
    ks = jax.random.split(key, 8)

    def u(k, shape, fan_in):
        bound = 1.0 / np.sqrt(fan_in)
        return jax.random.uniform(k, shape, jnp.float32, -bound, bound)

    return {
        "conv1_w": u(ks[0], (9, 1, 3, 3), 9),
        "conv1_b": u(ks[1], (9,), 9),
        "conv2_w": u(ks[2], (18, 9, 3, 3), 81),
        "conv2_b": u(ks[3], (18,), 81),
        "fc1_w": u(ks[4], (50, 450), 450),
        "fc1_b": u(ks[5], (50,), 450),
        "fc2_w": u(ks[6], (2, 50), 50),
        "fc2_b": u(ks[7], (2,), 50),
    }


def ref_forward(x_nchw, p):
    dn = ("NCHW", "OIHW", "NCHW")
    h = jax.lax.conv_general_dilated(x_nchw, p["conv1_w"], (1, 1), "VALID",
                                     dimension_numbers=dn)
    h = jnp.maximum(h + p["conv1_b"][None, :, None, None], 0.0)
    h = jax.lax.conv_general_dilated(h, p["conv2_w"], (1, 1), "VALID",
                                     dimension_numbers=dn)
    h = jnp.maximum(h + p["conv2_b"][None, :, None, None], 0.0)
    h = h.reshape(-1, 450)
    h = jnp.maximum(h @ p["fc1_w"].T + p["fc1_b"], 0.0)
    o = h @ p["fc2_w"].T + p["fc2_b"]
    return jax.nn.sigmoid(o[:, 0:1]), o[:, 1:2]


if __name__ == "__main__":
    key = jax.random.PRNGKey(0)
    pkey, xkey = jax.random.split(key)
    params = init_params(pkey)
    packed = pack_params(params)        # one-time, host-side packing

    # Input implied by the module: (N, 1, 9, 9) -> 3x3 valid -> 7x7 -> 3x3
    # valid -> 5x5 x 18 channels -> view(-1, 450).
    x = jax.random.normal(xkey, (2, 1, 9, 9), jnp.float32)

    fwd = jax.jit(sim2net_forward, static_argnames=("batch_tile",))
    ycls, yreg = fwd(x, packed)
    jax.block_until_ready((ycls, yreg))

    rcls, rreg = ref_forward(x, params)
    np.testing.assert_allclose(np.asarray(ycls), np.asarray(rcls),
                               rtol=2e-2, atol=2e-2)
    np.testing.assert_allclose(np.asarray(yreg), np.asarray(rreg),
                               rtol=2e-2, atol=2e-2)
    assert ycls.shape == (2, 1) and yreg.shape == (2, 1)
    assert ycls.dtype == jnp.float32 and yreg.dtype == jnp.float32

    # Exercise a multi-step batch grid (padding + pipelining + >=2 steps).
    x2 = jax.random.normal(jax.random.PRNGKey(1), (20, 1, 9, 9), jnp.float32)
    ycls2, yreg2 = fwd(x2, packed, batch_tile=8)
    jax.block_until_ready((ycls2, yreg2))
    rcls2, rreg2 = ref_forward(x2, params)
    np.testing.assert_allclose(np.asarray(ycls2), np.asarray(rcls2),
                               rtol=2e-2, atol=2e-2)
    np.testing.assert_allclose(np.asarray(yreg2), np.asarray(rreg2),
                               rtol=2e-2, atol=2e-2)

    print("KERNEL_OK")
</pallas_src>

<mosaic_0001>
module attributes {stable_mosaic.version = 11 : i64} {
  func.func @sim2net_kernel(%arg0: i32, %arg1: memref<8x128xbf16, #tpu.memory_space<vmem>>, %arg2: memref<128x441xbf16, #tpu.memory_space<vmem>>, %arg3: memref<1x441xf32, #tpu.memory_space<vmem>>, %arg4: memref<441x450xbf16, #tpu.memory_space<vmem>>, %arg5: memref<1x450xf32, #tpu.memory_space<vmem>>, %arg6: memref<450x50xbf16, #tpu.memory_space<vmem>>, %arg7: memref<1x50xf32, #tpu.memory_space<vmem>>, %arg8: memref<50x2xbf16, #tpu.memory_space<vmem>>, %arg9: memref<1x2xf32, #tpu.memory_space<vmem>>, %arg10: memref<8x2xf32, #tpu.memory_space<vmem>>) attributes {dimension_semantics = [#tpu.dimension_semantics<parallel>], iteration_bounds = array<i64: 1>, scalar_prefetch = 0 : i64, scratch_operands = 0 : i64, tpu.core_type = #tpu.core_type<tc>, window_params = [{transform_indices = @transform_0, window_bounds = array<i64: 8, 128>}, {pipeline_mode = #tpu.pipeline_mode<synchronous>, transform_indices = @transform_1, window_bounds = array<i64: 128, 441>}, {pipeline_mode = #tpu.pipeline_mode<synchronous>, transform_indices = @transform_2, window_bounds = array<i64: 1, 441>}, {pipeline_mode = #tpu.pipeline_mode<synchronous>, transform_indices = @transform_3, window_bounds = array<i64: 441, 450>}, {pipeline_mode = #tpu.pipeline_mode<synchronous>, transform_indices = @transform_4, window_bounds = array<i64: 1, 450>}, {pipeline_mode = #tpu.pipeline_mode<synchronous>, transform_indices = @transform_5, window_bounds = array<i64: 450, 50>}, {pipeline_mode = #tpu.pipeline_mode<synchronous>, transform_indices = @transform_6, window_bounds = array<i64: 1, 50>}, {pipeline_mode = #tpu.pipeline_mode<synchronous>, transform_indices = @transform_7, window_bounds = array<i64: 50, 2>}, {pipeline_mode = #tpu.pipeline_mode<synchronous>, transform_indices = @transform_8, window_bounds = array<i64: 1, 2>}, {transform_indices = @transform_9, window_bounds = array<i64: 8, 2>}]} {
    %c0 = arith.constant 0 : index
    %c0_0 = arith.constant 0 : index
    %0 = vector.load %arg1[%c0, %c0_0] : memref<8x128xbf16, #tpu.memory_space<vmem>>, vector<8x128xbf16>
    %c0_1 = arith.constant 0 : index
    %c0_2 = arith.constant 0 : index
    %1 = vector.load %arg2[%c0_1, %c0_2] : memref<128x441xbf16, #tpu.memory_space<vmem>>, vector<128x441xbf16>
    %cst = arith.constant dense<0.000000e+00> : vector<8x441xf32>
    %2 = tpu.matmul %0, %1, %cst {dimension_numbers = #tpu.dot_dimension_numbers<[1], [0], [0], [1], [0, 0, 1, 1], [], []>} : vector<8x128xbf16>, vector<128x441xbf16>, vector<8x441xf32> -> vector<8x441xf32>
    %c0_3 = arith.constant 0 : index
    %c0_4 = arith.constant 0 : index
    %3 = vector.load %arg3[%c0_3, %c0_4] : memref<1x441xf32, #tpu.memory_space<vmem>>, vector<1x441xf32>
    %4 = vector.broadcast %3 : vector<1x441xf32> to vector<8x441xf32>
    %5 = arith.addf %2, %4 : vector<8x441xf32>
    %cst_5 = arith.constant 0.000000e+00 : f32
    %6 = vector.broadcast %cst_5 : f32 to vector<8x441xf32>
    %7 = arith.maximumf %5, %6 : vector<8x441xf32>
    %8 = arith.truncf %7 : vector<8x441xf32> to vector<8x441xbf16>
    %c0_6 = arith.constant 0 : index
    %c0_7 = arith.constant 0 : index
    %9 = vector.load %arg4[%c0_6, %c0_7] : memref<441x450xbf16, #tpu.memory_space<vmem>>, vector<441x450xbf16>
    %cst_8 = arith.constant dense<0.000000e+00> : vector<8x450xf32>
    %10 = tpu.matmul %8, %9, %cst_8 {dimension_numbers = #tpu.dot_dimension_numbers<[1], [0], [0], [1], [0, 0, 1, 1], [], []>} : vector<8x441xbf16>, vector<441x450xbf16>, vector<8x450xf32> -> vector<8x450xf32>
    %c0_9 = arith.constant 0 : index
    %c0_10 = arith.constant 0 : index
    %11 = vector.load %arg5[%c0_9, %c0_10] : memref<1x450xf32, #tpu.memory_space<vmem>>, vector<1x450xf32>
    %12 = vector.broadcast %11 : vector<1x450xf32> to vector<8x450xf32>
    %13 = arith.addf %10, %12 : vector<8x450xf32>
    %cst_11 = arith.constant 0.000000e+00 : f32
    %14 = vector.broadcast %cst_11 : f32 to vector<8x450xf32>
    %15 = arith.maximumf %13, %14 : vector<8x450xf32>
    %16 = arith.truncf %15 : vector<8x450xf32> to vector<8x450xbf16>
    %c0_12 = arith.constant 0 : index
    %c0_13 = arith.constant 0 : index
    %17 = vector.load %arg6[%c0_12, %c0_13] : memref<450x50xbf16, #tpu.memory_space<vmem>>, vector<450x50xbf16>
    %cst_14 = arith.constant dense<0.000000e+00> : vector<8x50xf32>
    %18 = tpu.matmul %16, %17, %cst_14 {dimension_numbers = #tpu.dot_dimension_numbers<[1], [0], [0], [1], [0, 0, 1, 1], [], []>} : vector<8x450xbf16>, vector<450x50xbf16>, vector<8x50xf32> -> vector<8x50xf32>
    %c0_15 = arith.constant 0 : index
    %c0_16 = arith.constant 0 : index
    %19 = vector.load %arg7[%c0_15, %c0_16] : memref<1x50xf32, #tpu.memory_space<vmem>>, vector<1x50xf32>
    %20 = vector.broadcast %19 : vector<1x50xf32> to vector<8x50xf32>
    %21 = arith.addf %18, %20 : vector<8x50xf32>
    %cst_17 = arith.constant 0.000000e+00 : f32
    %22 = vector.broadcast %cst_17 : f32 to vector<8x50xf32>
    %23 = arith.maximumf %21, %22 : vector<8x50xf32>
    %24 = arith.truncf %23 : vector<8x50xf32> to vector<8x50xbf16>
    %c0_18 = arith.constant 0 : index
    %c0_19 = arith.constant 0 : index
    %25 = vector.load %arg8[%c0_18, %c0_19] : memref<50x2xbf16, #tpu.memory_space<vmem>>, vector<50x2xbf16>
    %cst_20 = arith.constant dense<0.000000e+00> : vector<8x2xf32>
    %26 = tpu.matmul %24, %25, %cst_20 {dimension_numbers = #tpu.dot_dimension_numbers<[1], [0], [0], [1], [0, 0, 1, 1], [], []>} : vector<8x50xbf16>, vector<50x2xbf16>, vector<8x2xf32> -> vector<8x2xf32>
    %c0_21 = arith.constant 0 : index
    %c0_22 = arith.constant 0 : index
    %27 = vector.load %arg9[%c0_21, %c0_22] : memref<1x2xf32, #tpu.memory_space<vmem>>, vector<1x2xf32>
    %28 = vector.broadcast %27 : vector<1x2xf32> to vector<8x2xf32>
    %29 = arith.addf %26, %28 : vector<8x2xf32>
    %30 = tpu.iota {dimensions = array<i32: 1>} : vector<8x2xi32>
    %c0_i32 = arith.constant 0 : i32
    %31 = vector.broadcast %c0_i32 : i32 to vector<8x2xi32>
    %32 = arith.cmpi eq, %30, %31 : vector<8x2xi32>
    %33 = arith.negf %29 : vector<8x2xf32>
    %34 = math.exp %33 : vector<8x2xf32>
    %cst_23 = arith.constant 1.000000e+00 : f32
    %35 = vector.broadcast %cst_23 : f32 to vector<8x2xf32>
    %36 = arith.addf %35, %34 : vector<8x2xf32>
    %37 = arith.divf %35, %36 : vector<8x2xf32>
    %38 = arith.select %32, %37, %29 : vector<8x2xi1>, vector<8x2xf32>
    %c0_24 = arith.constant 0 : index
    %c0_25 = arith.constant 0 : index
    %39 = vector.load %arg10[%c0_24, %c0_25] : memref<8x2xf32, #tpu.memory_space<vmem>>, vector<8x2xf32>
    tpu.vector_store %arg10[%c0_24, %c0_25], %38 {strides = array<i32>} : memref<8x2xf32, #tpu.memory_space<vmem>>, vector<8x2xf32>,
    return
  }
  func.func @transform_0(%arg0: i32) -> (i32, i32) {
    %c0_i32 = arith.constant 0 : i32
    %c0_i32_0 = arith.constant 0 : i32
    return %arg0, %c0_i32 : i32, i32
  }
  func.func @transform_1(%arg0: i32) -> (i32, i32) {
    %c0_i32 = arith.constant 0 : i32
    %c0_i32_0 = arith.constant 0 : i32
    %c0_i32_1 = arith.constant 0 : i32
    return %c0_i32, %c0_i32_0 : i32, i32
  }
  func.func @transform_2(%arg0: i32) -> (i32, i32) {
    %c0_i32 = arith.constant 0 : i32
    %c0_i32_0 = arith.constant 0 : i32
    %c0_i32_1 = arith.constant 0 : i32
    return %c0_i32, %c0_i32_0 : i32, i32
  }
  func.func @transform_3(%arg0: i32) -> (i32, i32) {
    %c0_i32 = arith.constant 0 : i32
    %c0_i32_0 = arith.constant 0 : i32
    %c0_i32_1 = arith.constant 0 : i32
    return %c0_i32, %c0_i32_0 : i32, i32
  }
  func.func @transform_4(%arg0: i32) -> (i32, i32) {
    %c0_i32 = arith.constant 0 : i32
    %c0_i32_0 = arith.constant 0 : i32
    %c0_i32_1 = arith.constant 0 : i32
    return %c0_i32, %c0_i32_0 : i32, i32
  }
  func.func @transform_5(%arg0: i32) -> (i32, i32) {
    %c0_i32 = arith.constant 0 : i32
    %c0_i32_0 = arith.constant 0 : i32
    %c0_i32_1 = arith.constant 0 : i32
    return %c0_i32, %c0_i32_0 : i32, i32
  }
  func.func @transform_6(%arg0: i32) -> (i32, i32) {
    %c0_i32 = arith.constant 0 : i32
    %c0_i32_0 = arith.constant 0 : i32
    %c0_i32_1 = arith.constant 0 : i32
    return %c0_i32, %c0_i32_0 : i32, i32
  }
  func.func @transform_7(%arg0: i32) -> (i32, i32) {
    %c0_i32 = arith.constant 0 : i32
    %c0_i32_0 = arith.constant 0 : i32
    %c0_i32_1 = arith.constant 0 : i32
    return %c0_i32, %c0_i32_0 : i32, i32
  }
  func.func @transform_8(%arg0: i32) -> (i32, i32) {
    %c0_i32 = arith.constant 0 : i32
    %c0_i32_0 = arith.constant 0 : i32
    %c0_i32_1 = arith.constant 0 : i32
    return %c0_i32, %c0_i32_0 : i32, i32
  }
  func.func @transform_9(%arg0: i32) -> (i32, i32) {
    %c0_i32 = arith.constant 0 : i32
    %c0_i32_0 = arith.constant 0 : i32
    return %arg0, %c0_i32 : i32, i32
  }
}

</mosaic_0001>

<llo_original>
// kernel: sim2net_forward.1
$region0: #{sim2net_forward.1}
  #allocation0 [shape = 'u32[]', space=smem, size = 0x4, offset = 0x4, fixed_abs, tag = 'smem constant byte address 0x4 - core index']
  #allocation1 [shape = 'u32[144,128]{1,0:T(1,128)}', space=vmem, size = 0x12000, scoped, tag = 'internal scratch']
  %s0 = inlined_call_operand.vmem [shape: bf16[8,128], index: 0, kind: input, shape index: {}]
  %s1 = inlined_call_operand.vmem [shape: bf16[128,441], index: 1, kind: input, shape index: {}]
  %s2 = inlined_call_operand.vmem [shape: f32[1,441], index: 2, kind: input, shape index: {}]
  %s3 = inlined_call_operand.vmem [shape: bf16[441,450], index: 3, kind: input, shape index: {}]
  %s4 = inlined_call_operand.vmem [shape: f32[1,450], index: 4, kind: input, shape index: {}]
  %s5 = inlined_call_operand.vmem [shape: bf16[450,50], index: 5, kind: input, shape index: {}]
  %s6 = inlined_call_operand.vmem [shape: f32[1,50], index: 6, kind: input, shape index: {}]
  %s7 = inlined_call_operand.vmem [shape: bf16[50,2], index: 7, kind: input, shape index: {}]
  %s8 = inlined_call_operand.vmem [shape: f32[1,2], index: 8, kind: input, shape index: {}]
  %s9 = inlined_call_operand.vmem [shape: f32[8,2], index: 9, kind: output, shape index: {}]
  %s10 = sld [smem:[#allocation0]]
  $region46: #{sim2net_forward.1} parent=0
    _
  %s12 = ssub.s32 1, %s10
  %s13 = scalar_select 0, %s12, %s10
  // Predicated region
  $region2: #{sim2net_forward.1} parent=0 // pred_check
    _
  $region3: #{sim2net_forward.1} parent=0 // pred_check_branch
    %15 = sbr.rel (0) target = $region5
  $region4: #{sim2net_forward.1} parent=0 // pred_region
    _
  $region5: #{sim2net_forward.1} parent=0 // pred_fallthru
    _
  // Predicated region
  $region6: #{sim2net_forward.1} parent=0 // pred_check
    _
  $region7: #{sim2net_forward.1} parent=0 // pred_check_branch
    %17 = sbr.rel (0) target = $region9
  $region8: #{sim2net_forward.1} parent=0 // pred_region
    _
  $region9: #{sim2net_forward.1} parent=0 // pred_fallthru
    _
  // Predicated region
  $region10: #{sim2net_forward.1} parent=0 // pred_check
    _
  $region11: #{sim2net_forward.1} parent=0 // pred_check_branch
    %19 = sbr.rel (0) target = $region13
  $region12: #{sim2net_forward.1} parent=0 // pred_region
    _
  $region13: #{sim2net_forward.1} parent=0 // pred_fallthru
    _
  // Predicated region
  $region14: #{sim2net_forward.1} parent=0 // pred_check
    _
  $region15: #{sim2net_forward.1} parent=0 // pred_check_branch
    %21 = sbr.rel (0) target = $region17
  $region16: #{sim2net_forward.1} parent=0 // pred_region
    _
  $region17: #{sim2net_forward.1} parent=0 // pred_fallthru
    _
  // Predicated region
  $region18: #{sim2net_forward.1} parent=0 // pred_check
    _
  $region19: #{sim2net_forward.1} parent=0 // pred_check_branch
    %23 = sbr.rel (0) target = $region21
  $region20: #{sim2net_forward.1} parent=0 // pred_region
    _
  $region21: #{sim2net_forward.1} parent=0 // pred_fallthru
    _
  // Predicated region
  $region22: #{sim2net_forward.1} parent=0 // pred_check
    _
  $region23: #{sim2net_forward.1} parent=0 // pred_check_branch
    %25 = sbr.rel (0) target = $region25
  $region24: #{sim2net_forward.1} parent=0 // pred_region
    _
  $region25: #{sim2net_forward.1} parent=0 // pred_fallthru
    _
  // Predicated region
  $region26: #{sim2net_forward.1} parent=0 // pred_check
    _
  $region27: #{sim2net_forward.1} parent=0 // pred_check_branch
    %27 = sbr.rel (0) target = $region29
  $region28: #{sim2net_forward.1} parent=0 // pred_region
    _
  $region29: #{sim2net_forward.1} parent=0 // pred_fallthru
    _
  // Predicated region
  $region30: #{sim2net_forward.1} parent=0 // pred_check
    _
  $region31: #{sim2net_forward.1} parent=0 // pred_check_branch
    %29 = sbr.rel (0) target = $region33
  $region32: #{sim2net_forward.1} parent=0 // pred_region
    _
  $region33: #{sim2net_forward.1} parent=0 // pred_fallthru
    _
  // Predicated region
  $region34: #{sim2net_forward.1} parent=0 // pred_check
    _
  $region35: #{sim2net_forward.1} parent=0 // pred_check_branch
    %31 = sbr.rel (0) target = $region37
  $region36: #{sim2net_forward.1} parent=0 // pred_region
    _
  $region37: #{sim2net_forward.1} parent=0 // pred_fallthru
    _
  %v33 = vld [vmem:[%s0] sm:$0xf]
  %v34 = vld [vmem:[%s1] sm:$0xff]
  %v35 = vld [vmem:[%s1 + $0x8] sm:$0xff]
  %v36 = vld [vmem:[%s1 + $0x10] sm:$0xff]
  %v37 = vld [vmem:[%s1 + $0x18] sm:$0xff]
  %v38 = vld [vmem:[%s1 + $0x20] sm:$0xff]
  %v39 = vld [vmem:[%s1 + $0x28] sm:$0xff]
  %v40 = vld [vmem:[%s1 + $0x30] sm:$0xff]
  %v41 = vld [vmem:[%s1 + $0x38] sm:$0xff]
  %v42 = vld [vmem:[%s1 + $0x40] sm:$0xff]
  %v43 = vld [vmem:[%s1 + $0x48] sm:$0xff]
  %v44 = vld [vmem:[%s1 + $0x50] sm:$0xff]
  %v45 = vld [vmem:[%s1 + $0x58] sm:$0xff]
  %v46 = vld [vmem:[%s1 + $0x60] sm:$0xff]
  %v47 = vld [vmem:[%s1 + $0x68] sm:$0xff]
  %v48 = vld [vmem:[%s1 + $0x70] sm:$0xff]
  %v49 = vld [vmem:[%s1 + $0x78] sm:$0xff]
  %v50 = vld [vmem:[%s1 + $0x80] sm:$0xff]
  %v51 = vld [vmem:[%s1 + $0x88] sm:$0xff]
  %v52 = vld [vmem:[%s1 + $0x90] sm:$0xff]
  %v53 = vld [vmem:[%s1 + $0x98] sm:$0xff]
  %v54 = vld [vmem:[%s1 + $0xa0] sm:$0xff]
  %v55 = vld [vmem:[%s1 + $0xa8] sm:$0xff]
  %v56 = vld [vmem:[%s1 + $0xb0] sm:$0xff]
  %v57 = vld [vmem:[%s1 + $0xb8] sm:$0xff]
  %v58 = vld [vmem:[%s1 + $0xc0] sm:$0xff]
  %v59 = vld [vmem:[%s1 + $0xc8] sm:$0xff]
  %v60 = vld [vmem:[%s1 + $0xd0] sm:$0xff]
  %v61 = vld [vmem:[%s1 + $0xd8] sm:$0xff]
  %v62 = vld [vmem:[%s1 + $0xe0] sm:$0xff]
  %v63 = vld [vmem:[%s1 + $0xe8] sm:$0xff]
  %v64 = vld [vmem:[%s1 + $0xf0] sm:$0xff]
  %v65 = vld [vmem:[%s1 + $0xf8] sm:$0xff]
  %v66 = vld [vmem:[%s2] sm:$0xf]
  %v68 = vlaneseq
  %v69 = vshrl.u32 %v68, 7
  %v70 = vsub.s32 0, %v69
  %v71 = vrot.slane %v66, %v70
  %v72 = vlaneseq
  %v73 = vshrl.u32 %v72, 7
  %v74 = vsub.s32 1, %v73
  %v75 = vrot.slane %v66, %v74
  %v76 = vlaneseq
  %v77 = vshrl.u32 %v76, 7
  %v78 = vsub.s32 2, %v77
  %v79 = vrot.slane %v66, %v78
  %v80 = vlaneseq
  %v81 = vshrl.u32 %v80, 7
  %v82 = vsub.s32 3, %v81
  %v83 = vrot.slane %v66, %v82
  %v120 = vunpack.c.l.b16 %v34
  %v121 = vunpack.c.h.b16 %v34
  %v122 = vunpack.c.l.b16 %v35
  %v123 = vunpack.c.h.b16 %v35
  %v124 = vunpack.c.l.b16 %v36
  %v125 = vunpack.c.h.b16 %v36
  %v126 = vunpack.c.l.b16 %v37
  %v127 = vunpack.c.h.b16 %v37
  %v128 = vunpack.c.l.b16 %v38
  %v129 = vunpack.c.h.b16 %v38
  %v130 = vunpack.c.l.b16 %v39
  %v131 = vunpack.c.h.b16 %v39
  %v132 = vunpack.c.l.b16 %v40
  %v133 = vunpack.c.h.b16 %v40
  %v134 = vunpack.c.l.b16 %v41
  %v135 = vunpack.c.h.b16 %v41
  %v136 = vunpack.c.l.b16 %v42
  %v137 = vunpack.c.h.b16 %v42
  %v138 = vunpack.c.l.b16 %v43
  %v139 = vunpack.c.h.b16 %v43
  %v140 = vunpack.c.l.b16 %v44
  %v141 = vunpack.c.h.b16 %v44
  %v142 = vunpack.c.l.b16 %v45
  %v143 = vunpack.c.h.b16 %v45
  %v144 = vunpack.c.l.b16 %v46
  %v145 = vunpack.c.h.b16 %v46
  %v146 = vunpack.c.l.b16 %v47
  %v147 = vunpack.c.h.b16 %v47
  %v148 = vunpack.c.l.b16 %v48
  %v149 = vunpack.c.h.b16 %v48
  %v150 = vunpack.c.l.b16 %v49
  %v151 = vunpack.c.h.b16 %v49
  %v152 = vunpack.c.l.b16 %v50
  %v153 = vunpack.c.h.b16 %v50
  %v154 = vunpack.c.l.b16 %v51
  %v155 = vunpack.c.h.b16 %v51
  %v156 = vunpack.c.l.b16 %v52
  %v157 = vunpack.c.h.b16 %v52
  %v158 = vunpack.c.l.b16 %v53
  %v159 = vunpack.c.h.b16 %v53
  %v160 = vunpack.c.l.b16 %v54
  %v161 = vunpack.c.h.b16 %v54
  %v162 = vunpack.c.l.b16 %v55
  %v163 = vunpack.c.h.b16 %v55
  %v164 = vunpack.c.l.b16 %v56
  %v165 = vunpack.c.h.b16 %v56
  %v166 = vunpack.c.l.b16 %v57
  %v167 = vunpack.c.h.b16 %v57
  %v168 = vunpack.c.l.b16 %v58
  %v169 = vunpack.c.h.b16 %v58
  %v170 = vunpack.c.l.b16 %v59
  %v171 = vunpack.c.h.b16 %v59
  %v172 = vunpack.c.l.b16 %v60
  %v173 = vunpack.c.h.b16 %v60
  %v174 = vunpack.c.l.b16 %v61
  %v175 = vunpack.c.h.b16 %v61
  %v176 = vunpack.c.l.b16 %v62
  %v177 = vunpack.c.h.b16 %v62
  %v178 = vunpack.c.l.b16 %v63
  %v179 = vunpack.c.h.b16 %v63
  %v180 = vunpack.c.l.b16 %v64
  %v181 = vunpack.c.h.b16 %v64
  %v182 = vunpack.c.l.b16 %v65
  %v183 = vunpack.c.h.b16 %v65
  %v184 = vpack.c.b16 %v124, %v120
  %v185 = vpack.c.b16 %v125, %v121
  %v186 = vpack.c.b16 %v126, %v122
  %v187 = vpack.c.b16 %v127, %v123
  %v188 = vpack.c.b16 %v132, %v128
  %v189 = vpack.c.b16 %v133, %v129
  %v190 = vpack.c.b16 %v134, %v130
  %v191 = vpack.c.b16 %v135, %v131
  %v192 = vpack.c.b16 %v140, %v136
  %v193 = vpack.c.b16 %v141, %v137
  %v194 = vpack.c.b16 %v142, %v138
  %v195 = vpack.c.b16 %v143, %v139
  %v196 = vpack.c.b16 %v148, %v144
  %v197 = vpack.c.b16 %v149, %v145
  %v198 = vpack.c.b16 %v150, %v146
  %v199 = vpack.c.b16 %v151, %v147
  %v200 = vpack.c.b16 %v156, %v152
  %v201 = vpack.c.b16 %v157, %v153
  %v202 = vpack.c.b16 %v158, %v154
  %v203 = vpack.c.b16 %v159, %v155
  %v204 = vpack.c.b16 %v164, %v160
  %v205 = vpack.c.b16 %v165, %v161
  %v206 = vpack.c.b16 %v166, %v162
  %v207 = vpack.c.b16 %v167, %v163
  %v208 = vpack.c.b16 %v172, %v168
  %v209 = vpack.c.b16 %v173, %v169
  %v210 = vpack.c.b16 %v174, %v170
  %v211 = vpack.c.b16 %v175, %v171
  %v212 = vpack.c.b16 %v180, %v176
  %v213 = vpack.c.b16 %v181, %v177
  %v214 = vpack.c.b16 %v182, %v178
  %v215 = vpack.c.b16 %v183, %v179
  %248 = vmatprep.subr.bf16.mxu0 %v185
  %249 = vmatpush1.bf16.msra.mxu0 %v184
  %250 = vmatprep.subr.bf16.mxu0 %v189
  %251 = vmatpush1.bf16.msra.mxu0 %v188
  %252 = vmatprep.subr.bf16.mxu0 %v193
  %253 = vmatpush1.bf16.msra.mxu0 %v192
  %254 = vmatprep.subr.bf16.mxu0 %v197
  %255 = vmatpush1.bf16.msra.mxu0 %v196
  %256 = vmatprep.subr.bf16.mxu0 %v201
  %257 = vmatpush1.bf16.msra.mxu0 %v200
  %258 = vmatprep.subr.bf16.mxu0 %v205
  %259 = vmatpush1.bf16.msra.mxu0 %v204
  %260 = vmatprep.subr.bf16.mxu0 %v209
  %261 = vmatpush1.bf16.msra.mxu0 %v208
  %262 = vmatprep.subr.bf16.mxu0 %v213
  %263 = vmatpush1.bf16.msra.mxu0 %v212
  %264 = vmatprep.subr.bf16.mxu0 0
  %265 = vmatpush1.bf16.msra.mxu0 0
  %266 = vmatprep.subr.bf16.mxu0 0
  %267 = vmatpush1.bf16.msra.mxu0 0
  %268 = vmatprep.subr.bf16.mxu0 0
  %269 = vmatpush1.bf16.msra.mxu0 0
  %270 = vmatprep.subr.bf16.mxu0 0
  %271 = vmatpush1.bf16.msra.mxu0 0
  %272 = vmatprep.subr.bf16.mxu0 0
  %273 = vmatpush1.bf16.msra.mxu0 0
  %274 = vmatprep.subr.bf16.mxu0 0
  %275 = vmatpush1.bf16.msra.mxu0 0
  %276 = vmatprep.subr.bf16.mxu0 0
  %277 = vmatpush1.bf16.msra.mxu0 0
  %278 = vmatprep.subr.bf16.mxu0 0
  %279 = vmatpush1.bf16.msra.mxu0 0
  %280 = vmatprep.mubr.bf16.mxu0 0
  %281 = vmatmul.mubr.bf16.gmra.mrb[0].mxu0 %v33
  %v282 = vpop.f32.mrb[0].mxu0
  %v283 = vadd.f32 %v71, %v282
  %v284 = vpop.f32.mrb[0].mxu0
  %v285 = vadd.f32 %v75, %v284
  %v286 = vpop.f32.mrb[0].mxu0
  %v287 = vpop.f32.mrb[0].mxu0
  %288 = vdwg.mxu0
  %289 = vmatprep.subr.bf16.mxu0 %v187
  %290 = vmatpush1.bf16.msra.mxu0 %v186
  %291 = vmatprep.subr.bf16.mxu0 %v191
  %292 = vmatpush1.bf16.msra.mxu0 %v190
  %293 = vmatprep.subr.bf16.mxu0 %v195
  %294 = vmatpush1.bf16.msra.mxu0 %v194
  %295 = vmatprep.subr.bf16.mxu0 %v199
  %296 = vmatpush1.bf16.msra.mxu0 %v198
  %297 = vmatprep.subr.bf16.mxu0 %v203
  %298 = vmatpush1.bf16.msra.mxu0 %v202
  %299 = vmatprep.subr.bf16.mxu0 %v207
  %300 = vmatpush1.bf16.msra.mxu0 %v206
  %301 = vmatprep.subr.bf16.mxu0 %v211
  %302 = vmatpush1.bf16.msra.mxu0 %v210
  %303 = vmatprep.subr.bf16.mxu0 %v215
  %304 = vmatpush1.bf16.msra.mxu0 %v214
  %305 = vmatprep.subr.bf16.mxu0 0
  %306 = vmatpush1.bf16.msra.mxu0 0
  %307 = vmatprep.subr.bf16.mxu0 0
  %308 = vmatpush1.bf16.msra.mxu0 0
  %309 = vmatprep.subr.bf16.mxu0 0
  %310 = vmatpush1.bf16.msra.mxu0 0
  %311 = vmatprep.subr.bf16.mxu0 0
  %312 = vmatpush1.bf16.msra.mxu0 0
  %313 = vmatprep.subr.bf16.mxu0 0
  %314 = vmatpush1.bf16.msra.mxu0 0
  %315 = vmatprep.subr.bf16.mxu0 0
  %316 = vmatpush1.bf16.msra.mxu0 0
  %317 = vmatprep.subr.bf16.mxu0 0
  %318 = vmatpush1.bf16.msra.mxu0 0
  %319 = vmatprep.subr.bf16.mxu0 0
  %320 = vmatpush1.bf16.msra.mxu0 0
  %321 = vmatprep.mubr.bf16.mxu0 0
  %322 = vmatmul.mubr.bf16.gmra.mrb[0].mxu0 %v33
  %v323 = vpop.f32.mrb[0].mxu0
  %v324 = vadd.f32 %v79, %v323
  %v325 = vpop.f32.mrb[0].mxu0
  %v326 = vadd.f32 %v83, %v325
  %v327 = vpop.f32.mrb[0].mxu0
  %v328 = vpop.f32.mrb[0].mxu0
  %329 = vdwg.mxu0
  %v330 = vmax.f32 %v283, 0.0
  %v331 = vmax.f32 %v285, 0.0
  %v332 = vmax.f32 %v324, 0.0
  %v333 = vmax.f32 %v326, 0.0
  %v334 = vpack.c.bf16 %v330, %v330
  %v335 = vpack.c.bf16 %v331, %v331
  %v336 = vpack.c.bf16 %v332, %v332
  %v337 = vpack.c.bf16 %v333, %v333
  %v338 = vld [vmem:[%s3] sm:$0xff]
  %v339 = vld [vmem:[%s3 + $0x8] sm:$0xff]
  %v340 = vld [vmem:[%s3 + $0x10] sm:$0xff]
  %v341 = vld [vmem:[%s3 + $0x18] sm:$0xff]
  %v342 = vld [vmem:[%s3 + $0x20] sm:$0xff]
  %v343 = vld [vmem:[%s3 + $0x28] sm:$0xff]
  %v344 = vld [vmem:[%s3 + $0x30] sm:$0xff]
  %v345 = vld [vmem:[%s3 + $0x38] sm:$0xff]
  %v346 = vld [vmem:[%s3 + $0x40] sm:$0xff]
  %v347 = vld [vmem:[%s3 + $0x48] sm:$0xff]
  %v348 = vld [vmem:[%s3 + $0x50] sm:$0xff]
  %v349 = vld [vmem:[%s3 + $0x58] sm:$0xff]
  %v350 = vld [vmem:[%s3 + $0x60] sm:$0xff]
  %v351 = vld [vmem:[%s3 + $0x68] sm:$0xff]
  %v352 = vld [vmem:[%s3 + $0x70] sm:$0xff]
  %v353 = vld [vmem:[%s3 + $0x78] sm:$0xff]
  %v354 = vld [vmem:[%s3 + $0x80] sm:$0xff]
  %v355 = vld [vmem:[%s3 + $0x88] sm:$0xff]
  %v356 = vld [vmem:[%s3 + $0x90] sm:$0xff]
  %v357 = vld [vmem:[%s3 + $0x98] sm:$0xff]
  %v358 = vld [vmem:[%s3 + $0xa0] sm:$0xff]
  %v359 = vld [vmem:[%s3 + $0xa8] sm:$0xff]
  %v360 = vld [vmem:[%s3 + $0xb0] sm:$0xff]
  %v361 = vld [vmem:[%s3 + $0xb8] sm:$0xff]
  %v362 = vld [vmem:[%s3 + $0xc0] sm:$0xff]
  %v363 = vld [vmem:[%s3 + $0xc8] sm:$0xff]
  %v364 = vld [vmem:[%s3 + $0xd0] sm:$0xff]
  %v365 = vld [vmem:[%s3 + $0xd8] sm:$0xff]
  %v366 = vld [vmem:[%s3 + $0xe0] sm:$0xff]
  %v367 = vld [vmem:[%s3 + $0xe8] sm:$0xff]
  %v368 = vld [vmem:[%s3 + $0xf0] sm:$0xff]
  %v369 = vld [vmem:[%s3 + $0xf8] sm:$0xff]
  %v370 = vld [vmem:[%s3 + $0x100] sm:$0xff]
  %v371 = vld [vmem:[%s3 + $0x108] sm:$0xff]
  %v372 = vld [vmem:[%s3 + $0x110] sm:$0xff]
  %v373 = vld [vmem:[%s3 + $0x118] sm:$0xff]
  %v374 = vld [vmem:[%s3 + $0x120] sm:$0xff]
  %v375 = vld [vmem:[%s3 + $0x128] sm:$0xff]
  %v376 = vld [vmem:[%s3 + $0x130] sm:$0xff]
  %v377 = vld [vmem:[%s3 + $0x138] sm:$0xff]
  %v378 = vld [vmem:[%s3 + $0x140] sm:$0xff]
  %v379 = vld [vmem:[%s3 + $0x148] sm:$0xff]
  %v380 = vld [vmem:[%s3 + $0x150] sm:$0xff]
  %v381 = vld [vmem:[%s3 + $0x158] sm:$0xff]
  %v382 = vld [vmem:[%s3 + $0x160] sm:$0xff]
  %v383 = vld [vmem:[%s3 + $0x168] sm:$0xff]
  %v384 = vld [vmem:[%s3 + $0x170] sm:$0xff]
  %v385 = vld [vmem:[%s3 + $0x178] sm:$0xff]
  %v386 = vld [vmem:[%s3 + $0x180] sm:$0xff]
  %v387 = vld [vmem:[%s3 + $0x188] sm:$0xff]
  %v388 = vld [vmem:[%s3 + $0x190] sm:$0xff]
  %v389 = vld [vmem:[%s3 + $0x198] sm:$0xff]
  %v390 = vld [vmem:[%s3 + $0x1a0] sm:$0xff]
  %v391 = vld [vmem:[%s3 + $0x1a8] sm:$0xff]
  %v392 = vld [vmem:[%s3 + $0x1b0] sm:$0xff]
  %v393 = vld [vmem:[%s3 + $0x1b8] sm:$0xff]
  %v394 = vld [vmem:[%s3 + $0x1c0] sm:$0xff]
  %v395 = vld [vmem:[%s3 + $0x1c8] sm:$0xff]
  %v396 = vld [vmem:[%s3 + $0x1d0] sm:$0xff]
  %v397 = vld [vmem:[%s3 + $0x1d8] sm:$0xff]
  %v398 = vld [vmem:[%s3 + $0x1e0] sm:$0xff]
  %v399 = vld [vmem:[%s3 + $0x1e8] sm:$0xff]
  %v400 = vld [vmem:[%s3 + $0x1f0] sm:$0xff]
  %v401 = vld [vmem:[%s3 + $0x1f8] sm:$0xff]
  %v402 = vld [vmem:[%s3 + $0x200] sm:$0xff]
  %v403 = vld [vmem:[%s3 + $0x208] sm:$0xff]
  %v404 = vld [vmem:[%s3 + $0x210] sm:$0xff]
  %v405 = vld [vmem:[%s3 + $0x218] sm:$0xff]
  %v406 = vld [vmem:[%s3 + $0x220] sm:$0xff]
  %v407 = vld [vmem:[%s3 + $0x228] sm:$0xff]
  %v408 = vld [vmem:[%s3 + $0x230] sm:$0xff]
  %v409 = vld [vmem:[%s3 + $0x238] sm:$0xff]
  %v410 = vld [vmem:[%s3 + $0x240] sm:$0xff]
  %v411 = vld [vmem:[%s3 + $0x248] sm:$0xff]
  %v412 = vld [vmem:[%s3 + $0x250] sm:$0xff]
  %v413 = vld [vmem:[%s3 + $0x258] sm:$0xff]
  %v414 = vld [vmem:[%s3 + $0x260] sm:$0xff]
  %v415 = vld [vmem:[%s3 + $0x268] sm:$0xff]
  %v416 = vld [vmem:[%s3 + $0x270] sm:$0xff]
  %v417 = vld [vmem:[%s3 + $0x278] sm:$0xff]
  %v418 = vld [vmem:[%s3 + $0x280] sm:$0xff]
  %v419 = vld [vmem:[%s3 + $0x288] sm:$0xff]
  %v420 = vld [vmem:[%s3 + $0x290] sm:$0xff]
  %v421 = vld [vmem:[%s3 + $0x298] sm:$0xff]
  %v422 = vld [vmem:[%s3 + $0x2a0] sm:$0xff]
  %v423 = vld [vmem:[%s3 + $0x2a8] sm:$0xff]
  %v424 = vld [vmem:[%s3 + $0x2b0] sm:$0xff]
  %v425 = vld [vmem:[%s3 + $0x2b8] sm:$0xff]
  %v426 = vld [vmem:[%s3 + $0x2c0] sm:$0xff]
  %v427 = vld [vmem:[%s3 + $0x2c8] sm:$0xff]
  %v428 = vld [vmem:[%s3 + $0x2d0] sm:$0xff]
  %v429 = vld [vmem:[%s3 + $0x2d8] sm:$0xff]
  %v430 = vld [vmem:[%s3 + $0x2e0] sm:$0xff]
  %v431 = vld [vmem:[%s3 + $0x2e8] sm:$0xff]
  %v432 = vld [vmem:[%s3 + $0x2f0] sm:$0xff]
  %v433 = vld [vmem:[%s3 + $0x2f8] sm:$0xff]
  %v434 = vld [vmem:[%s3 + $0x300] sm:$0xff]
  %v435 = vld [vmem:[%s3 + $0x308] sm:$0xff]
  %v436 = vld [vmem:[%s3 + $0x310] sm:$0xff]
  %v437 = vld [vmem:[%s3 + $0x318] sm:$0xff]
  %v438 = vld [vmem:[%s3 + $0x320] sm:$0xff]
  %v439 = vld [vmem:[%s3 + $0x328] sm:$0xff]
  %v440 = vld [vmem:[%s3 + $0x330] sm:$0xff]
  %v441 = vld [vmem:[%s3 + $0x338] sm:$0xff]
  %v442 = vld [vmem:[%s3 + $0x340] sm:$0xff]
  %v443 = vld [vmem:[%s3 + $0x348] sm:$0xff]
  %v444 = vld [vmem:[%s3 + $0x350] sm:$0xff]
  %v445 = vld [vmem:[%s3 + $0x358] sm:$0xff]
  %v446 = vld [vmem:[%s3 + $0x360] sm:$0xff]
  %v447 = vld [vmem:[%s3 + $0x368] sm:$0xff]
  %v448 = vld [vmem:[%s3 + $0x370] sm:$0x11]
  %v449 = vld [vmem:[%s3 + $0x378] sm:$0x11]
  %v450 = vld [vmem:[%s4] sm:$0xf]
  %v452 = vlaneseq
  %v453 = vshrl.u32 %v452, 7
  %v454 = vsub.s32 0, %v453
  %v455 = vrot.slane %v450, %v454
  %v456 = vlaneseq
  %v457 = vshrl.u32 %v456, 7
  %v458 = vsub.s32 1, %v457
  %v459 = vrot.slane %v450, %v458
  %v460 = vlaneseq
  %v461 = vshrl.u32 %v460, 7
  %v462 = vsub.s32 2, %v461
  %v463 = vrot.slane %v450, %v462
  %v464 = vlaneseq
  %v465 = vshrl.u32 %v464, 7
  %v466 = vsub.s32 3, %v465
  %v467 = vrot.slane %v450, %v466
  %v584 = vunpack.c.l.b16 %v338
  %v585 = vunpack.c.h.b16 %v338
  %v586 = vunpack.c.l.b16 %v339
  %v587 = vunpack.c.h.b16 %v339
  %v588 = vunpack.c.l.b16 %v340
  %v589 = vunpack.c.h.b16 %v340
  %v590 = vunpack.c.l.b16 %v341
  %v591 = vunpack.c.h.b16 %v341
  %v592 = vunpack.c.l.b16 %v342
  %v593 = vunpack.c.h.b16 %v342
  %v594 = vunpack.c.l.b16 %v343
  %v595 = vunpack.c.h.b16 %v343
  %v596 = vunpack.c.l.b16 %v344
  %v597 = vunpack.c.h.b16 %v344
  %v598 = vunpack.c.l.b16 %v345
  %v599 = vunpack.c.h.b16 %v345
  %v600 = vunpack.c.l.b16 %v346
  %v601 = vunpack.c.h.b16 %v346
  %v602 = vunpack.c.l.b16 %v347
  %v603 = vunpack.c.h.b16 %v347
  %v604 = vunpack.c.l.b16 %v348
  %v605 = vunpack.c.h.b16 %v348
  %v606 = vunpack.c.l.b16 %v349
  %v607 = vunpack.c.h.b16 %v349
  %v608 = vunpack.c.l.b16 %v350
  %v609 = vunpack.c.h.b16 %v350
  %v610 = vunpack.c.l.b16 %v351
  %v611 = vunpack.c.h.b16 %v351
  %v612 = vunpack.c.l.b16 %v352
  %v613 = vunpack.c.h.b16 %v352
  %v614 = vunpack.c.l.b16 %v353
  %v615 = vunpack.c.h.b16 %v353
  %v616 = vunpack.c.l.b16 %v354
  %v617 = vunpack.c.h.b16 %v354
  %v618 = vunpack.c.l.b16 %v355
  %v619 = vunpack.c.h.b16 %v355
  %v620 = vunpack.c.l.b16 %v356
  %v621 = vunpack.c.h.b16 %v356
  %v622 = vunpack.c.l.b16 %v357
  %v623 = vunpack.c.h.b16 %v357
  %v624 = vunpack.c.l.b16 %v358
  %v625 = vunpack.c.h.b16 %v358
  %v626 = vunpack.c.l.b16 %v359
  %v627 = vunpack.c.h.b16 %v359
  %v628 = vunpack.c.l.b16 %v360
  %v629 = vunpack.c.h.b16 %v360
  %v630 = vunpack.c.l.b16 %v361
  %v631 = vunpack.c.h.b16 %v361
  %v632 = vunpack.c.l.b16 %v362
  %v633 = vunpack.c.h.b16 %v362
  %v634 = vunpack.c.l.b16 %v363
  %v635 = vunpack.c.h.b16 %v363
  %v636 = vunpack.c.l.b16 %v364
  %v637 = vunpack.c.h.b16 %v364
  %v638 = vunpack.c.l.b16 %v365
  %v639 = vunpack.c.h.b16 %v365
  %v640 = vunpack.c.l.b16 %v366
  %v641 = vunpack.c.h.b16 %v366
  %v642 = vunpack.c.l.b16 %v367
  %v643 = vunpack.c.h.b16 %v367
  %v644 = vunpack.c.l.b16 %v368
  %v645 = vunpack.c.h.b16 %v368
  %v646 = vunpack.c.l.b16 %v369
  %v647 = vunpack.c.h.b16 %v369
  %v648 = vunpack.c.l.b16 %v370
  %v649 = vunpack.c.h.b16 %v370
  %v650 = vunpack.c.l.b16 %v371
  %v651 = vunpack.c.h.b16 %v371
  %v652 = vunpack.c.l.b16 %v372
  %v653 = vunpack.c.h.b16 %v372
  %v654 = vunpack.c.l.b16 %v373
  %v655 = vunpack.c.h.b16 %v373
  %v656 = vunpack.c.l.b16 %v374
  %v657 = vunpack.c.h.b16 %v374
  %v658 = vunpack.c.l.b16 %v375
  %v659 = vunpack.c.h.b16 %v375
  %v660 = vunpack.c.l.b16 %v376
  %v661 = vunpack.c.h.b16 %v376
  %v662 = vunpack.c.l.b16 %v377
  %v663 = vunpack.c.h.b16 %v377
  %v664 = vunpack.c.l.b16 %v378
  %v665 = vunpack.c.h.b16 %v378
  %v666 = vunpack.c.l.b16 %v379
  %v667 = vunpack.c.h.b16 %v379
  %v668 = vunpack.c.l.b16 %v380
  %v669 = vunpack.c.h.b16 %v380
  %v670 = vunpack.c.l.b16 %v381
  %v671 = vunpack.c.h.b16 %v381
  %v672 = vunpack.c.l.b16 %v382
  %v673 = vunpack.c.h.b16 %v382
  %v674 = vunpack.c.l.b16 %v383
  %v675 = vunpack.c.h.b16 %v383
  %v676 = vunpack.c.l.b16 %v384
  %v677 = vunpack.c.h.b16 %v384
  %v678 = vunpack.c.l.b16 %v385
  %v679 = vunpack.c.h.b16 %v385
  %v680 = vunpack.c.l.b16 %v386
  %v681 = vunpack.c.h.b16 %v386
  %v682 = vunpack.c.l.b16 %v387
  %v683 = vunpack.c.h.b16 %v387
  %v684 = vunpack.c.l.b16 %v388
  %v685 = vunpack.c.h.b16 %v388
  %v686 = vunpack.c.l.b16 %v389
  %v687 = vunpack.c.h.b16 %v389
  %v688 = vunpack.c.l.b16 %v390
  %v689 = vunpack.c.h.b16 %v390
  %v690 = vunpack.c.l.b16 %v391
  %v691 = vunpack.c.h.b16 %v391
  %v692 = vunpack.c.l.b16 %v392
  %v693 = vunpack.c.h.b16 %v392
  %v694 = vunpack.c.l.b16 %v393
  %v695 = vunpack.c.h.b16 %v393
  %v696 = vunpack.c.l.b16 %v394
  %v697 = vunpack.c.h.b16 %v394
  %v698 = vunpack.c.l.b16 %v395
  %v699 = vunpack.c.h.b16 %v395
  %v700 = vunpack.c.l.b16 %v396
  %v701 = vunpack.c.h.b16 %v396
  %v702 = vunpack.c.l.b16 %v397
  %v703 = vunpack.c.h.b16 %v397
  %v704 = vunpack.c.l.b16 %v398
  %v705 = vunpack.c.h.b16 %v398
  %v706 = vunpack.c.l.b16 %v399
  %v707 = vunpack.c.h.b16 %v399
  %v708 = vunpack.c.l.b16 %v400
  %v709 = vunpack.c.h.b16 %v400
  %v710 = vunpack.c.l.b16 %v401
  %v711 = vunpack.c.h.b16 %v401
  %v712 = vunpack.c.l.b16 %v402
  %v713 = vunpack.c.h.b16 %v402
  %v714 = vunpack.c.l.b16 %v403
  %v715 = vunpack.c.h.b16 %v403
  %v716 = vunpack.c.l.b16 %v404
  %v717 = vunpack.c.h.b16 %v404
  %v718 = vunpack.c.l.b16 %v405
  %v719 = vunpack.c.h.b16 %v405
  %v720 = vunpack.c.l.b16 %v406
  %v721 = vunpack.c.h.b16 %v406
  %v722 = vunpack.c.l.b16 %v407
  %v723 = vunpack.c.h.b16 %v407
  %v724 = vunpack.c.l.b16 %v408
  %v725 = vunpack.c.h.b16 %v408
  %v726 = vunpack.c.l.b16 %v409
  %v727 = vunpack.c.h.b16 %v409
  %v728 = vunpack.c.l.b16 %v410
  %v729 = vunpack.c.h.b16 %v410
  %v730 = vunpack.c.l.b16 %v411
  %v731 = vunpack.c.h.b16 %v411
  %v732 = vunpack.c.l.b16 %v412
  %v733 = vunpack.c.h.b16 %v412
  %v734 = vunpack.c.l.b16 %v413
  %v735 = vunpack.c.h.b16 %v413
  %v736 = vunpack.c.l.b16 %v414
  %v737 = vunpack.c.h.b16 %v414
  %v738 = vunpack.c.l.b16 %v415
  %v739 = vunpack.c.h.b16 %v415
  %v740 = vunpack.c.l.b16 %v416
  %v741 = vunpack.c.h.b16 %v416
  %v742 = vunpack.c.l.b16 %v417
  %v743 = vunpack.c.h.b16 %v417
  %v744 = vunpack.c.l.b16 %v418
  %v745 = vunpack.c.h.b16 %v418
  %v746 = vunpack.c.l.b16 %v419
  %v747 = vunpack.c.h.b16 %v419
  %v748 = vunpack.c.l.b16 %v420
  %v749 = vunpack.c.h.b16 %v420
  %v750 = vunpack.c.l.b16 %v421
  %v751 = vunpack.c.h.b16 %v421
  %v752 = vunpack.c.l.b16 %v422
  %v753 = vunpack.c.h.b16 %v422
  %v754 = vunpack.c.l.b16 %v423
  %v755 = vunpack.c.h.b16 %v423
  %v756 = vunpack.c.l.b16 %v424
  %v757 = vunpack.c.h.b16 %v424
  %v758 = vunpack.c.l.b16 %v425
  %v759 = vunpack.c.h.b16 %v425
  %v760 = vunpack.c.l.b16 %v426
  %v761 = vunpack.c.h.b16 %v426
  %v762 = vunpack.c.l.b16 %v427
  %v763 = vunpack.c.h.b16 %v427
  %v764 = vunpack.c.l.b16 %v428
  %v765 = vunpack.c.h.b16 %v428
  %v766 = vunpack.c.l.b16 %v429
  %v767 = vunpack.c.h.b16 %v429
  %v768 = vunpack.c.l.b16 %v430
  %v769 = vunpack.c.h.b16 %v430
  %v770 = vunpack.c.l.b16 %v431
  %v771 = vunpack.c.h.b16 %v431
  %v772 = vunpack.c.l.b16 %v432
  %v773 = vunpack.c.h.b16 %v432
  %v774 = vunpack.c.l.b16 %v433
  %v775 = vunpack.c.h.b16 %v433
  %v776 = vunpack.c.l.b16 %v434
  %v777 = vunpack.c.h.b16 %v434
  %v778 = vunpack.c.l.b16 %v435
  %v779 = vunpack.c.h.b16 %v435
  %v780 = vunpack.c.l.b16 %v436
  %v781 = vunpack.c.h.b16 %v436
  %v782 = vunpack.c.l.b16 %v437
  %v783 = vunpack.c.h.b16 %v437
  %v784 = vunpack.c.l.b16 %v438
  %v785 = vunpack.c.h.b16 %v438
  %v786 = vunpack.c.l.b16 %v439
  %v787 = vunpack.c.h.b16 %v439
  %v788 = vunpack.c.l.b16 %v440
  %v789 = vunpack.c.h.b16 %v440
  %v790 = vunpack.c.l.b16 %v441
  %v791 = vunpack.c.h.b16 %v441
  %v792 = vunpack.c.l.b16 %v442
  %v793 = vunpack.c.h.b16 %v442
  %v794 = vunpack.c.l.b16 %v443
  %v795 = vunpack.c.h.b16 %v443
  %v796 = vunpack.c.l.b16 %v444
  %v797 = vunpack.c.h.b16 %v444
  %v798 = vunpack.c.l.b16 %v445
  %v799 = vunpack.c.h.b16 %v445
  %v800 = vunpack.c.l.b16 %v446
  %v801 = vunpack.c.h.b16 %v446
  %v802 = vunpack.c.l.b16 %v447
  %v803 = vunpack.c.h.b16 %v447
  %v804 = vunpack.c.l.b16 %v448
  %v805 = vunpack.c.h.b16 %v448
  %v806 = vunpack.c.l.b16 %v449
  %v807 = vunpack.c.h.b16 %v449
  %v808 = vpack.c.b16 %v588, %v584
  %v809 = vpack.c.b16 %v589, %v585
  %v810 = vpack.c.b16 %v590, %v586
  %v811 = vpack.c.b16 %v591, %v587
  %v812 = vpack.c.b16 %v596, %v592
  %v813 = vpack.c.b16 %v597, %v593
  %v814 = vpack.c.b16 %v598, %v594
  %v815 = vpack.c.b16 %v599, %v595
  %v816 = vpack.c.b16 %v604, %v600
  %v817 = vpack.c.b16 %v605, %v601
  %v818 = vpack.c.b16 %v606, %v602
  %v819 = vpack.c.b16 %v607, %v603
  %v820 = vpack.c.b16 %v612, %v608
  %v821 = vpack.c.b16 %v613, %v609
  %v822 = vpack.c.b16 %v614, %v610
  %v823 = vpack.c.b16 %v615, %v611
  %v824 = vpack.c.b16 %v620, %v616
  %v825 = vpack.c.b16 %v621, %v617
  %v826 = vpack.c.b16 %v622, %v618
  %v827 = vpack.c.b16 %v623, %v619
  %v828 = vpack.c.b16 %v628, %v624
  %v829 = vpack.c.b16 %v629, %v625
  %v830 = vpack.c.b16 %v630, %v626
  %v831 = vpack.c.b16 %v631, %v627
  %v832 = vpack.c.b16 %v636, %v632
  %v833 = vpack.c.b16 %v637, %v633
  %v834 = vpack.c.b16 %v638, %v634
  %v835 = vpack.c.b16 %v639, %v635
  %v836 = vpack.c.b16 %v644, %v640
  %v837 = vpack.c.b16 %v645, %v641
  %v838 = vpack.c.b16 %v646, %v642
  %v839 = vpack.c.b16 %v647, %v643
  %v840 = vpack.c.b16 %v652, %v648
  %v841 = vpack.c.b16 %v653, %v649
  %v842 = vpack.c.b16 %v654, %v650
  %v843 = vpack.c.b16 %v655, %v651
  %v844 = vpack.c.b16 %v660, %v656
  %v845 = vpack.c.b16 %v661, %v657
  %v846 = vpack.c.b16 %v662, %v658
  %v847 = vpack.c.b16 %v663, %v659
  %v848 = vpack.c.b16 %v668, %v664
  %v849 = vpack.c.b16 %v669, %v665
  %v850 = vpack.c.b16 %v670, %v666
  %v851 = vpack.c.b16 %v671, %v667
  %v852 = vpack.c.b16 %v676, %v672
  %v853 = vpack.c.b16 %v677, %v673
  %v854 = vpack.c.b16 %v678, %v674
  %v855 = vpack.c.b16 %v679, %v675
  %v856 = vpack.c.b16 %v684, %v680
  %v857 = vpack.c.b16 %v685, %v681
  %v858 = vpack.c.b16 %v686, %v682
  %v859 = vpack.c.b16 %v687, %v683
  %v860 = vpack.c.b16 %v692, %v688
  %v861 = vpack.c.b16 %v693, %v689
  %v862 = vpack.c.b16 %v694, %v690
  %v863 = vpack.c.b16 %v695, %v691
  %v864 = vpack.c.b16 %v700, %v696
  %v865 = vpack.c.b16 %v701, %v697
  %v866 = vpack.c.b16 %v702, %v698
  %v867 = vpack.c.b16 %v703, %v699
  %v868 = vpack.c.b16 %v708, %v704
  %v869 = vpack.c.b16 %v709, %v705
  %v870 = vpack.c.b16 %v710, %v706
  %v871 = vpack.c.b16 %v711, %v707
  %v872 = vpack.c.b16 %v716, %v712
  %v873 = vpack.c.b16 %v717, %v713
  %v874 = vpack.c.b16 %v718, %v714
  %v875 = vpack.c.b16 %v719, %v715
  %v876 = vpack.c.b16 %v724, %v720
  %v877 = vpack.c.b16 %v725, %v721
  %v878 = vpack.c.b16 %v726, %v722
  %v879 = vpack.c.b16 %v727, %v723
  %v880 = vpack.c.b16 %v732, %v728
  %v881 = vpack.c.b16 %v733, %v729
  %v882 = vpack.c.b16 %v734, %v730
  %v883 = vpack.c.b16 %v735, %v731
  %v884 = vpack.c.b16 %v740, %v736
  %v885 = vpack.c.b16 %v741, %v737
  %v886 = vpack.c.b16 %v742, %v738
  %v887 = vpack.c.b16 %v743, %v739
  %v888 = vpack.c.b16 %v748, %v744
  %v889 = vpack.c.b16 %v749, %v745
  %v890 = vpack.c.b16 %v750, %v746
  %v891 = vpack.c.b16 %v751, %v747
  %v892 = vpack.c.b16 %v756, %v752
  %v893 = vpack.c.b16 %v757, %v753
  %v894 = vpack.c.b16 %v758, %v754
  %v895 = vpack.c.b16 %v759, %v755
  %v896 = vpack.c.b16 %v764, %v760
  %v897 = vpack.c.b16 %v765, %v761
  %v898 = vpack.c.b16 %v766, %v762
  %v899 = vpack.c.b16 %v767, %v763
  %v900 = vpack.c.b16 %v772, %v768
  %v901 = vpack.c.b16 %v773, %v769
  %v902 = vpack.c.b16 %v774, %v770
  %v903 = vpack.c.b16 %v775, %v771
  %v904 = vpack.c.b16 %v780, %v776
  %v905 = vpack.c.b16 %v781, %v777
  %v906 = vpack.c.b16 %v782, %v778
  %v907 = vpack.c.b16 %v783, %v779
  %v908 = vpack.c.b16 %v788, %v784
  %v909 = vpack.c.b16 %v789, %v785
  %v910 = vpack.c.b16 %v790, %v786
  %v911 = vpack.c.b16 %v791, %v787
  %v912 = vpack.c.b16 %v796, %v792
  %v913 = vpack.c.b16 %v797, %v793
  %v914 = vpack.c.b16 %v798, %v794
  %v915 = vpack.c.b16 %v799, %v795
  %v916 = vpack.c.b16 %v804, %v800
  %v917 = vpack.c.b16 %v805, %v801
  %v918 = vpack.c.b16 %v806, %v802
  %v919 = vpack.c.b16 %v807, %v803
  %vm1028 = vcmask 465920
  %v1030 = vsel %vm1028, %v337, 0
  %vm1032 = vcmask 1043456
  %vm1033 = vcmask 1044480
  %v1034 = vsel %vm1032, 4294967295, 65535
  %v1035 = vsel %vm1033, %v1034, 0
  %v1037 = vand.u32 %v916, %v1035
  %v1040 = vand.u32 %v917, %v1035
  %v1043 = vand.u32 %v918, %v1035
  %v1046 = vand.u32 %v919, %v1035
  %1048 = vmatprep.subr.bf16.mxu0 %v809
  %1049 = vmatpush1.bf16.msra.mxu0 %v808
  %1050 = vmatprep.subr.bf16.mxu0 %v813
  %1051 = vmatpush1.bf16.msra.mxu0 %v812
  %1052 = vmatprep.subr.bf16.mxu0 %v817
  %1053 = vmatpush1.bf16.msra.mxu0 %v816
  %1054 = vmatprep.subr.bf16.mxu0 %v821
  %1055 = vmatpush1.bf16.msra.mxu0 %v820
  %1056 = vmatprep.subr.bf16.mxu0 %v825
  %1057 = vmatpush1.bf16.msra.mxu0 %v824
  %1058 = vmatprep.subr.bf16.mxu0 %v829
  %1059 = vmatpush1.bf16.msra.mxu0 %v828
  %1060 = vmatprep.subr.bf16.mxu0 %v833
  %1061 = vmatpush1.bf16.msra.mxu0 %v832
  %1062 = vmatprep.subr.bf16.mxu0 %v837
  %1063 = vmatpush1.bf16.msra.mxu0 %v836
  %1064 = vmatprep.subr.bf16.mxu0 %v841
  %1065 = vmatpush1.bf16.msra.mxu0 %v840
  %1066 = vmatprep.subr.bf16.mxu0 %v845
  %1067 = vmatpush1.bf16.msra.mxu0 %v844
  %1068 = vmatprep.subr.bf16.mxu0 %v849
  %1069 = vmatpush1.bf16.msra.mxu0 %v848
  %1070 = vmatprep.subr.bf16.mxu0 %v853
  %1071 = vmatpush1.bf16.msra.mxu0 %v852
  %1072 = vmatprep.subr.bf16.mxu0 %v857
  %1073 = vmatpush1.bf16.msra.mxu0 %v856
  %1074 = vmatprep.subr.bf16.mxu0 %v861
  %1075 = vmatpush1.bf16.msra.mxu0 %v860
  %1076 = vmatprep.subr.bf16.mxu0 %v865
  %1077 = vmatpush1.bf16.msra.mxu0 %v864
  %1078 = vmatprep.subr.bf16.mxu0 %v869
  %1079 = vmatpush1.bf16.msra.mxu0 %v868
  %1080 = vmatprep.mubr.bf16.mxu0 %v335
  %1081 = vmatmul.mubr.bf16.gmra.mrb[0].mxu0 %v334
  %v1082 = vpop.f32.mrb[0].mxu0
  %v1083 = vadd.f32 %v455, %v1082
  %v1084 = vpop.f32.mrb[0].mxu0
  %v1085 = vadd.f32 %v459, %v1084
  %v1086 = vpop.f32.mrb[0].mxu0
  %v1087 = vpop.f32.mrb[0].mxu0
  %1088 = vdwg.mxu0
  %1089 = vmatprep.subr.bf16.mxu0 %v873
  %1090 = vmatpush1.bf16.msra.mxu0 %v872
  %1091 = vmatprep.subr.bf16.mxu0 %v877
  %1092 = vmatpush1.bf16.msra.mxu0 %v876
  %1093 = vmatprep.subr.bf16.mxu0 %v881
  %1094 = vmatpush1.bf16.msra.mxu0 %v880
  %1095 = vmatprep.subr.bf16.mxu0 %v885
  %1096 = vmatpush1.bf16.msra.mxu0 %v884
  %1097 = vmatprep.subr.bf16.mxu0 %v889
  %1098 = vmatpush1.bf16.msra.mxu0 %v888
  %1099 = vmatprep.subr.bf16.mxu0 %v893
  %1100 = vmatpush1.bf16.msra.mxu0 %v892
  %1101 = vmatprep.subr.bf16.mxu0 %v897
  %1102 = vmatpush1.bf16.msra.mxu0 %v896
  %1103 = vmatprep.subr.bf16.mxu0 %v901
  %1104 = vmatpush1.bf16.msra.mxu0 %v900
  %1105 = vmatprep.subr.bf16.mxu0 %v905
  %1106 = vmatpush1.bf16.msra.mxu0 %v904
  %1107 = vmatprep.subr.bf16.mxu0 %v909
  %1108 = vmatpush1.bf16.msra.mxu0 %v908
  %1109 = vmatprep.subr.bf16.mxu0 %v913
  %1110 = vmatpush1.bf16.msra.mxu0 %v912
  %1111 = vmatprep.subr.bf16.mxu0 %v1040
  %1112 = vmatpush1.bf16.msra.mxu0 %v1037
  %1113 = vmatprep.subr.bf16.mxu0 0
  %1114 = vmatpush1.bf16.msra.mxu0 0
  %1115 = vmatprep.subr.bf16.mxu0 0
  %1116 = vmatpush1.bf16.msra.mxu0 0
  %1117 = vmatprep.subr.bf16.mxu0 0
  %1118 = vmatpush1.bf16.msra.mxu0 0
  %1119 = vmatprep.subr.bf16.mxu0 0
  %1120 = vmatpush1.bf16.msra.mxu0 0
  %1121 = vmatprep.mubr.bf16.mxu0 %v1030
  %1122 = vmatmul.mubr.bf16.gmra.mrb[0].mxu0 %v336
  %v1123 = vpop.f32.mrb[0].mxu0
  %v1124 = vadd.f32 %v1083, %v1123
  %v1125 = vpop.f32.mrb[0].mxu0
  %v1126 = vadd.f32 %v1085, %v1125
  %v1127 = vpop.f32.mrb[0].mxu0
  %v1128 = vpop.f32.mrb[0].mxu0
  %1129 = vdwg.mxu0
  %1130 = vmatprep.subr.bf16.mxu0 %v811
  %1131 = vmatpush1.bf16.msra.mxu0 %v810
  %1132 = vmatprep.subr.bf16.mxu0 %v815
  %1133 = vmatpush1.bf16.msra.mxu0 %v814
  %1134 = vmatprep.subr.bf16.mxu0 %v819
  %1135 = vmatpush1.bf16.msra.mxu0 %v818
  %1136 = vmatprep.subr.bf16.mxu0 %v823
  %1137 = vmatpush1.bf16.msra.mxu0 %v822
  %1138 = vmatprep.subr.bf16.mxu0 %v827
  %1139 = vmatpush1.bf16.msra.mxu0 %v826
  %1140 = vmatprep.subr.bf16.mxu0 %v831
  %1141 = vmatpush1.bf16.msra.mxu0 %v830
  %1142 = vmatprep.subr.bf16.mxu0 %v835
  %1143 = vmatpush1.bf16.msra.mxu0 %v834
  %1144 = vmatprep.subr.bf16.mxu0 %v839
  %1145 = vmatpush1.bf16.msra.mxu0 %v838
  %1146 = vmatprep.subr.bf16.mxu0 %v843
  %1147 = vmatpush1.bf16.msra.mxu0 %v842
  %1148 = vmatprep.subr.bf16.mxu0 %v847
  %1149 = vmatpush1.bf16.msra.mxu0 %v846
  %1150 = vmatprep.subr.bf16.mxu0 %v851
  %1151 = vmatpush1.bf16.msra.mxu0 %v850
  %1152 = vmatprep.subr.bf16.mxu0 %v855
  %1153 = vmatpush1.bf16.msra.mxu0 %v854
  %1154 = vmatprep.subr.bf16.mxu0 %v859
  %1155 = vmatpush1.bf16.msra.mxu0 %v858
  %1156 = vmatprep.subr.bf16.mxu0 %v863
  %1157 = vmatpush1.bf16.msra.mxu0 %v862
  %1158 = vmatprep.subr.bf16.mxu0 %v867
  %1159 = vmatpush1.bf16.msra.mxu0 %v866
  %1160 = vmatprep.subr.bf16.mxu0 %v871
  %1161 = vmatpush1.bf16.msra.mxu0 %v870
  %1162 = vmatprep.mubr.bf16.mxu0 %v335
  %1163 = vmatmul.mubr.bf16.gmra.mrb[0].mxu0 %v334
  %v1164 = vpop.f32.mrb[0].mxu0
  %v1165 = vadd.f32 %v463, %v1164
  %v1166 = vpop.f32.mrb[0].mxu0
  %v1167 = vadd.f32 %v467, %v1166
  %v1168 = vpop.f32.mrb[0].mxu0
  %v1169 = vpop.f32.mrb[0].mxu0
  %1170 = vdwg.mxu0
  %1171 = vmatprep.subr.bf16.mxu0 %v875
  %1172 = vmatpush1.bf16.msra.mxu0 %v874
  %1173 = vmatprep.subr.bf16.mxu0 %v879
  %1174 = vmatpush1.bf16.msra.mxu0 %v878
  %1175 = vmatprep.subr.bf16.mxu0 %v883
  %1176 = vmatpush1.bf16.msra.mxu0 %v882
  %1177 = vmatprep.subr.bf16.mxu0 %v887
  %1178 = vmatpush1.bf16.msra.mxu0 %v886
  %1179 = vmatprep.subr.bf16.mxu0 %v891
  %1180 = vmatpush1.bf16.msra.mxu0 %v890
  %1181 = vmatprep.subr.bf16.mxu0 %v895
  %1182 = vmatpush1.bf16.msra.mxu0 %v894
  %1183 = vmatprep.subr.bf16.mxu0 %v899
  %1184 = vmatpush1.bf16.msra.mxu0 %v898
  %1185 = vmatprep.subr.bf16.mxu0 %v903
  %1186 = vmatpush1.bf16.msra.mxu0 %v902
  %1187 = vmatprep.subr.bf16.mxu0 %v907
  %1188 = vmatpush1.bf16.msra.mxu0 %v906
  %1189 = vmatprep.subr.bf16.mxu0 %v911
  %1190 = vmatpush1.bf16.msra.mxu0 %v910
  %1191 = vmatprep.subr.bf16.mxu0 %v915
  %1192 = vmatpush1.bf16.msra.mxu0 %v914
  %1193 = vmatprep.subr.bf16.mxu0 %v1046
  %1194 = vmatpush1.bf16.msra.mxu0 %v1043
  %1195 = vmatprep.subr.bf16.mxu0 0
  %1196 = vmatpush1.bf16.msra.mxu0 0
  %1197 = vmatprep.subr.bf16.mxu0 0
  %1198 = vmatpush1.bf16.msra.mxu0 0
  %1199 = vmatprep.subr.bf16.mxu0 0
  %1200 = vmatpush1.bf16.msra.mxu0 0
  %1201 = vmatprep.subr.bf16.mxu0 0
  %1202 = vmatpush1.bf16.msra.mxu0 0
  %1203 = vmatprep.mubr.bf16.mxu0 %v1030
  %1204 = vmatmul.mubr.bf16.gmra.mrb[0].mxu0 %v336
  %v1205 = vpop.f32.mrb[0].mxu0
  %v1206 = vadd.f32 %v1165, %v1205
  %v1207 = vpop.f32.mrb[0].mxu0
  %v1208 = vadd.f32 %v1167, %v1207
  %v1209 = vpop.f32.mrb[0].mxu0
  %v1210 = vpop.f32.mrb[0].mxu0
  %1211 = vdwg.mxu0
  %v1212 = vmax.f32 %v1124, 0.0
  %v1213 = vmax.f32 %v1126, 0.0
  %v1214 = vmax.f32 %v1206, 0.0
  %v1215 = vmax.f32 %v1208, 0.0
  %v1216 = vpack.c.bf16 %v1212, %v1212
  %v1217 = vpack.c.bf16 %v1213, %v1213
  %v1218 = vpack.c.bf16 %v1214, %v1214
  %v1219 = vpack.c.bf16 %v1215, %v1215
  %v1220 = vld [vmem:[%s5] sm:$0xf]
  %v1221 = vld [vmem:[%s5 + $0x4] sm:$0xf]
  %v1222 = vld [vmem:[%s5 + $0x8] sm:$0xf]
  %v1223 = vld [vmem:[%s5 + $0xc] sm:$0xf]
  %v1224 = vld [vmem:[%s5 + $0x10] sm:$0xf]
  %v1225 = vld [vmem:[%s5 + $0x14] sm:$0xf]
  %v1226 = vld [vmem:[%s5 + $0x18] sm:$0xf]
  %v1227 = vld [vmem:[%s5 + $0x1c] sm:$0xf]
  %v1228 = vld [vmem:[%s5 + $0x20] sm:$0xf]
  %v1229 = vld [vmem:[%s5 + $0x24] sm:$0xf]
  %v1230 = vld [vmem:[%s5 + $0x28] sm:$0xf]
  %v1231 = vld [vmem:[%s5 + $0x2c] sm:$0xf]
  %v1232 = vld [vmem:[%s5 + $0x30] sm:$0xf]
  %v1233 = vld [vmem:[%s5 + $0x34] sm:$0xf]
  %v1234 = vld [vmem:[%s5 + $0x38] sm:$0xf]
  %v1235 = vld [vmem:[%s5 + $0x3c] sm:$0xf]
  %v1236 = vld [vmem:[%s5 + $0x40] sm:$0xf]
  %v1237 = vld [vmem:[%s5 + $0x44] sm:$0xf]
  %v1238 = vld [vmem:[%s5 + $0x48] sm:$0xf]
  %v1239 = vld [vmem:[%s5 + $0x4c] sm:$0xf]
  %v1240 = vld [vmem:[%s5 + $0x50] sm:$0xf]
  %v1241 = vld [vmem:[%s5 + $0x54] sm:$0xf]
  %v1242 = vld [vmem:[%s5 + $0x58] sm:$0xf]
  %v1243 = vld [vmem:[%s5 + $0x5c] sm:$0xf]
  %v1244 = vld [vmem:[%s5 + $0x60] sm:$0xf]
  %v1245 = vld [vmem:[%s5 + $0x64] sm:$0xf]
  %v1246 = vld [vmem:[%s5 + $0x68] sm:$0xf]
  %v1247 = vld [vmem:[%s5 + $0x6c] sm:$0xf]
  %v1248 = vld [vmem:[%s5 + $0x70] sm:$0xf]
  %v1249 = vld [vmem:[%s5 + $0x74] sm:$0xf]
  %v1250 = vld [vmem:[%s5 + $0x78] sm:$0xf]
  %v1251 = vld [vmem:[%s5 + $0x7c] sm:$0xf]
  %v1252 = vld [vmem:[%s5 + $0x80] sm:$0xf]
  %v1253 = vld [vmem:[%s5 + $0x84] sm:$0xf]
  %v1254 = vld [vmem:[%s5 + $0x88] sm:$0xf]
  %v1255 = vld [vmem:[%s5 + $0x8c] sm:$0xf]
  %v1256 = vld [vmem:[%s5 + $0x90] sm:$0xf]
  %v1257 = vld [vmem:[%s5 + $0x94] sm:$0xf]
  %v1258 = vld [vmem:[%s5 + $0x98] sm:$0xf]
  %v1259 = vld [vmem:[%s5 + $0x9c] sm:$0xf]
  %v1260 = vld [vmem:[%s5 + $0xa0] sm:$0xf]
  %v1261 = vld [vmem:[%s5 + $0xa4] sm:$0xf]
  %v1262 = vld [vmem:[%s5 + $0xa8] sm:$0xf]
  %v1263 = vld [vmem:[%s5 + $0xac] sm:$0xf]
  %v1264 = vld [vmem:[%s5 + $0xb0] sm:$0xf]
  %v1265 = vld [vmem:[%s5 + $0xb4] sm:$0xf]
  %v1266 = vld [vmem:[%s5 + $0xb8] sm:$0xf]
  %v1267 = vld [vmem:[%s5 + $0xbc] sm:$0xf]
  %v1268 = vld [vmem:[%s5 + $0xc0] sm:$0xf]
  %v1269 = vld [vmem:[%s5 + $0xc4] sm:$0xf]
  %v1270 = vld [vmem:[%s5 + $0xc8] sm:$0xf]
  %v1271 = vld [vmem:[%s5 + $0xcc] sm:$0xf]
  %v1272 = vld [vmem:[%s5 + $0xd0] sm:$0xf]
  %v1273 = vld [vmem:[%s5 + $0xd4] sm:$0xf]
  %v1274 = vld [vmem:[%s5 + $0xd8] sm:$0xf]
  %v1275 = vld [vmem:[%s5 + $0xdc] sm:$0xf]
  %v1276 = vld [vmem:[%s5 + $0xe0] sm:$0x1]
  %v1277 = vld [vmem:[%s6] sm:$0x1]
  %v1279 = vlaneseq
  %v1280 = vshrl.u32 %v1279, 7
  %v1281 = vsub.s32 0, %v1280
  %v1282 = vrot.slane %v1277, %v1281
  %v1341 = vunpack.c.l.b16 %v1220
  %v1342 = vunpack.c.l.b16 %v1221
  %v1343 = vunpack.c.l.b16 %v1222
  %v1344 = vunpack.c.l.b16 %v1223
  %v1345 = vunpack.c.l.b16 %v1224
  %v1346 = vunpack.c.l.b16 %v1225
  %v1347 = vunpack.c.l.b16 %v1226
  %v1348 = vunpack.c.l.b16 %v1227
  %v1349 = vunpack.c.l.b16 %v1228
  %v1350 = vunpack.c.l.b16 %v1229
  %v1351 = vunpack.c.l.b16 %v1230
  %v1352 = vunpack.c.l.b16 %v1231
  %v1353 = vunpack.c.l.b16 %v1232
  %v1354 = vunpack.c.l.b16 %v1233
  %v1355 = vunpack.c.l.b16 %v1234
  %v1356 = vunpack.c.l.b16 %v1235
  %v1357 = vunpack.c.l.b16 %v1236
  %v1358 = vunpack.c.l.b16 %v1237
  %v1359 = vunpack.c.l.b16 %v1238
  %v1360 = vunpack.c.l.b16 %v1239
  %v1361 = vunpack.c.l.b16 %v1240
  %v1362 = vunpack.c.l.b16 %v1241
  %v1363 = vunpack.c.l.b16 %v1242
  %v1364 = vunpack.c.l.b16 %v1243
  %v1365 = vunpack.c.l.b16 %v1244
  %v1366 = vunpack.c.l.b16 %v1245
  %v1367 = vunpack.c.l.b16 %v1246
  %v1368 = vunpack.c.l.b16 %v1247
  %v1369 = vunpack.c.l.b16 %v1248
  %v1370 = vunpack.c.l.b16 %v1249
  %v1371 = vunpack.c.l.b16 %v1250
  %v1372 = vunpack.c.l.b16 %v1251
  %v1373 = vunpack.c.l.b16 %v1252
  %v1374 = vunpack.c.l.b16 %v1253
  %v1375 = vunpack.c.l.b16 %v1254
  %v1376 = vunpack.c.l.b16 %v1255
  %v1377 = vunpack.c.l.b16 %v1256
  %v1378 = vunpack.c.l.b16 %v1257
  %v1379 = vunpack.c.l.b16 %v1258
  %v1380 = vunpack.c.l.b16 %v1259
  %v1381 = vunpack.c.l.b16 %v1260
  %v1382 = vunpack.c.l.b16 %v1261
  %v1383 = vunpack.c.l.b16 %v1262
  %v1384 = vunpack.c.l.b16 %v1263
  %v1385 = vunpack.c.l.b16 %v1264
  %v1386 = vunpack.c.l.b16 %v1265
  %v1387 = vunpack.c.l.b16 %v1266
  %v1388 = vunpack.c.l.b16 %v1267
  %v1389 = vunpack.c.l.b16 %v1268
  %v1390 = vunpack.c.l.b16 %v1269
  %v1391 = vunpack.c.l.b16 %v1270
  %v1392 = vunpack.c.l.b16 %v1271
  %v1393 = vunpack.c.l.b16 %v1272
  %v1394 = vunpack.c.l.b16 %v1273
  %v1395 = vunpack.c.l.b16 %v1274
  %v1396 = vunpack.c.l.b16 %v1275
  %v1397 = vunpack.c.l.b16 %v1276
  %v1398 = vpack.c.b16 %v1342, %v1341
  %v1399 = vpack.c.b16 %v1344, %v1343
  %v1400 = vpack.c.b16 %v1346, %v1345
  %v1401 = vpack.c.b16 %v1348, %v1347
  %v1402 = vpack.c.b16 %v1350, %v1349
  %v1403 = vpack.c.b16 %v1352, %v1351
  %v1404 = vpack.c.b16 %v1354, %v1353
  %v1405 = vpack.c.b16 %v1356, %v1355
  %v1406 = vpack.c.b16 %v1358, %v1357
  %v1407 = vpack.c.b16 %v1360, %v1359
  %v1408 = vpack.c.b16 %v1362, %v1361
  %v1409 = vpack.c.b16 %v1364, %v1363
  %v1410 = vpack.c.b16 %v1366, %v1365
  %v1411 = vpack.c.b16 %v1368, %v1367
  %v1412 = vpack.c.b16 %v1370, %v1369
  %v1413 = vpack.c.b16 %v1372, %v1371
  %v1414 = vpack.c.b16 %v1374, %v1373
  %v1415 = vpack.c.b16 %v1376, %v1375
  %v1416 = vpack.c.b16 %v1378, %v1377
  %v1417 = vpack.c.b16 %v1380, %v1379
  %v1418 = vpack.c.b16 %v1382, %v1381
  %v1419 = vpack.c.b16 %v1384, %v1383
  %v1420 = vpack.c.b16 %v1386, %v1385
  %v1421 = vpack.c.b16 %v1388, %v1387
  %v1422 = vpack.c.b16 %v1390, %v1389
  %v1423 = vpack.c.b16 %v1392, %v1391
  %v1424 = vpack.c.b16 %v1394, %v1393
  %v1425 = vpack.c.b16 %v1396, %v1395
  %v1426 = vpack.c.b16 %v1397, %v1397
  %vm1455 = vcmask 539648
  %v1457 = vsel %vm1455, %v1219, 0
  %vm1459 = vcmask 1040384
  %v1461 = vsel %vm1459, %v1426, 0
  %1463 = vmatprep.subr.bf16.mxu0 0
  %1464 = vmatpush1.bf16.msra.mxu0 %v1398
  %1465 = vmatprep.subr.bf16.mxu0 0
  %1466 = vmatpush1.bf16.msra.mxu0 %v1399
  %1467 = vmatprep.subr.bf16.mxu0 0
  %1468 = vmatpush1.bf16.msra.mxu0 %v1400
  %1469 = vmatprep.subr.bf16.mxu0 0
  %1470 = vmatpush1.bf16.msra.mxu0 %v1401
  %1471 = vmatprep.subr.bf16.mxu0 0
  %1472 = vmatpush1.bf16.msra.mxu0 %v1402
  %1473 = vmatprep.subr.bf16.mxu0 0
  %1474 = vmatpush1.bf16.msra.mxu0 %v1403
  %1475 = vmatprep.subr.bf16.mxu0 0
  %1476 = vmatpush1.bf16.msra.mxu0 %v1404
  %1477 = vmatprep.subr.bf16.mxu0 0
  %1478 = vmatpush1.bf16.msra.mxu0 %v1405
  %1479 = vmatprep.subr.bf16.mxu0 0
  %1480 = vmatpush1.bf16.msra.mxu0 %v1406
  %1481 = vmatprep.subr.bf16.mxu0 0
  %1482 = vmatpush1.bf16.msra.mxu0 %v1407
  %1483 = vmatprep.subr.bf16.mxu0 0
  %1484 = vmatpush1.bf16.msra.mxu0 %v1408
  %1485 = vmatprep.subr.bf16.mxu0 0
  %1486 = vmatpush1.bf16.msra.mxu0 %v1409
  %1487 = vmatprep.subr.bf16.mxu0 0
  %1488 = vmatpush1.bf16.msra.mxu0 %v1410
  %1489 = vmatprep.subr.bf16.mxu0 0
  %1490 = vmatpush1.bf16.msra.mxu0 %v1411
  %1491 = vmatprep.subr.bf16.mxu0 0
  %1492 = vmatpush1.bf16.msra.mxu0 %v1412
  %1493 = vmatprep.subr.bf16.mxu0 0
  %1494 = vmatpush1.bf16.msra.mxu0 %v1413
  %1495 = vmatprep.mubr.bf16.mxu0 %v1217
  %1496 = vmatmul.mubr.bf16.gmra.mrb[0].mxu0 %v1216
  %v1497 = vpop.f32.mrb[0].mxu0
  %v1498 = vadd.f32 %v1282, %v1497
  %v1499 = vpop.f32.mrb[0].mxu0
  %v1500 = vpop.f32.mrb[0].mxu0
  %v1501 = vpop.f32.mrb[0].mxu0
  %1502 = vdwg.mxu0
  %1503 = vmatprep.subr.bf16.mxu0 0
  %1504 = vmatpush1.bf16.msra.mxu0 %v1414
  %1505 = vmatprep.subr.bf16.mxu0 0
  %1506 = vmatpush1.bf16.msra.mxu0 %v1415
  %1507 = vmatprep.subr.bf16.mxu0 0
  %1508 = vmatpush1.bf16.msra.mxu0 %v1416
  %1509 = vmatprep.subr.bf16.mxu0 0
  %1510 = vmatpush1.bf16.msra.mxu0 %v1417
  %1511 = vmatprep.subr.bf16.mxu0 0
  %1512 = vmatpush1.bf16.msra.mxu0 %v1418
  %1513 = vmatprep.subr.bf16.mxu0 0
  %1514 = vmatpush1.bf16.msra.mxu0 %v1419
  %1515 = vmatprep.subr.bf16.mxu0 0
  %1516 = vmatpush1.bf16.msra.mxu0 %v1420
  %1517 = vmatprep.subr.bf16.mxu0 0
  %1518 = vmatpush1.bf16.msra.mxu0 %v1421
  %1519 = vmatprep.subr.bf16.mxu0 0
  %1520 = vmatpush1.bf16.msra.mxu0 %v1422
  %1521 = vmatprep.subr.bf16.mxu0 0
  %1522 = vmatpush1.bf16.msra.mxu0 %v1423
  %1523 = vmatprep.subr.bf16.mxu0 0
  %1524 = vmatpush1.bf16.msra.mxu0 %v1424
  %1525 = vmatprep.subr.bf16.mxu0 0
  %1526 = vmatpush1.bf16.msra.mxu0 %v1425
  %1527 = vmatprep.subr.bf16.mxu0 0
  %1528 = vmatpush1.bf16.msra.mxu0 %v1461
  %1529 = vmatprep.subr.bf16.mxu0 0
  %1530 = vmatpush1.bf16.msra.mxu0 0
  %1531 = vmatprep.subr.bf16.mxu0 0
  %1532 = vmatpush1.bf16.msra.mxu0 0
  %1533 = vmatprep.subr.bf16.mxu0 0
  %1534 = vmatpush1.bf16.msra.mxu0 0
  %1535 = vmatprep.mubr.bf16.mxu0 %v1457
  %1536 = vmatmul.mubr.bf16.gmra.mrb[0].mxu0 %v1218
  %v1537 = vpop.f32.mrb[0].mxu0
  %v1538 = vadd.f32 %v1498, %v1537
  %v1539 = vpop.f32.mrb[0].mxu0
  %v1540 = vpop.f32.mrb[0].mxu0
  %v1541 = vpop.f32.mrb[0].mxu0
  %1542 = vdwg.mxu0
  %v1543 = vmax.f32 %v1538, 0.0
  %v1544 = vpack.c.bf16 %v1543, %v1543
  %v1545 = vld [vmem:[%s7] sm:$0xf]
  %v1546 = vld [vmem:[%s7 + $0x4] sm:$0xf]
  %v1547 = vld [vmem:[%s7 + $0x8] sm:$0xf]
  %v1548 = vld [vmem:[%s7 + $0xc] sm:$0xf]
  %v1549 = vld [vmem:[%s7 + $0x10] sm:$0xf]
  %v1550 = vld [vmem:[%s7 + $0x14] sm:$0xf]
  %v1551 = vld [vmem:[%s7 + $0x18] sm:$0x1]
  %v1552 = vld [vmem:[%s8] sm:$0x1]
  %v1554 = vlaneseq
  %v1555 = vshrl.u32 %v1554, 7
  %v1556 = vsub.s32 0, %v1555
  %v1557 = vrot.slane %v1552, %v1556
  %v1566 = vunpack.c.l.b16 %v1545
  %v1567 = vunpack.c.l.b16 %v1546
  %v1568 = vunpack.c.l.b16 %v1547
  %v1569 = vunpack.c.l.b16 %v1548
  %v1570 = vunpack.c.l.b16 %v1549
  %v1571 = vunpack.c.l.b16 %v1550
  %v1572 = vunpack.c.l.b16 %v1551
  %v1573 = vpack.c.b16 %v1567, %v1566
  %v1574 = vpack.c.b16 %v1569, %v1568
  %v1575 = vpack.c.b16 %v1571, %v1570
  %v1576 = vpack.c.b16 %v1572, %v1572
  %vm1580 = vcmask 408576
  %v1582 = vsel %vm1580, %v1544, 0
  %v1585 = vsel %vm1459, %v1576, 0
  %1587 = vmatprep.subr.bf16.mxu0 0
  %1588 = vmatpush1.bf16.msra.mxu0 %v1573
  %1589 = vmatprep.subr.bf16.mxu0 0
  %1590 = vmatpush1.bf16.msra.mxu0 %v1574
  %1591 = vmatprep.subr.bf16.mxu0 0
  %1592 = vmatpush1.bf16.msra.mxu0 %v1575
  %1593 = vmatprep.subr.bf16.mxu0 0
  %1594 = vmatpush1.bf16.msra.mxu0 %v1585
  %1595 = vmatprep.subr.bf16.mxu0 0
  %1596 = vmatpush1.bf16.msra.mxu0 0
  %1597 = vmatprep.subr.bf16.mxu0 0
  %1598 = vmatpush1.bf16.msra.mxu0 0
  %1599 = vmatprep.subr.bf16.mxu0 0
  %1600 = vmatpush1.bf16.msra.mxu0 0
  %1601 = vmatprep.subr.bf16.mxu0 0
  %1602 = vmatpush1.bf16.msra.mxu0 0
  %1603 = vmatprep.subr.bf16.mxu0 0
  %1604 = vmatpush1.bf16.msra.mxu0 0
  %1605 = vmatprep.subr.bf16.mxu0 0
  %1606 = vmatpush1.bf16.msra.mxu0 0
  %1607 = vmatprep.subr.bf16.mxu0 0
  %1608 = vmatpush1.bf16.msra.mxu0 0
  %1609 = vmatprep.subr.bf16.mxu0 0
  %1610 = vmatpush1.bf16.msra.mxu0 0
  %1611 = vmatprep.subr.bf16.mxu0 0
  %1612 = vmatpush1.bf16.msra.mxu0 0
  %1613 = vmatprep.subr.bf16.mxu0 0
  %1614 = vmatpush1.bf16.msra.mxu0 0
  %1615 = vmatprep.subr.bf16.mxu0 0
  %1616 = vmatpush1.bf16.msra.mxu0 0
  %1617 = vmatprep.subr.bf16.mxu0 0
  %1618 = vmatpush1.bf16.msra.mxu0 0
  %1619 = vmatprep.mubr.bf16.mxu0 0
  %1620 = vmatmul.mubr.bf16.gmra.mrb[0].mxu0 %v1582
  %v1621 = vpop.f32.mrb[0].mxu0
  %v1622 = vadd.f32 %v1557, %v1621
  %v1623 = vpop.f32.mrb[0].mxu0
  %v1624 = vpop.f32.mrb[0].mxu0
  %v1625 = vpop.f32.mrb[0].mxu0
  %1626 = vdwg.mxu0
  %v1627 = vlaneseq
  %v1628 = vand.u32 %v1627, 127
  %vm1629 = vcmp.eq.s32.totalorder %v1628, 0
  %v1630 = vxor.u32 %v1622, 2147483648
  %v1631 = vmul.f32 %v1630, 1.442695
  %v1632 = vpow.pop %v1631
  %v1633 = vadd.f32 %v1632, 1.0
  %v1634 = vrcp.pop %v1633
  %v1635 = vmul.f32 1.0, %v1634
  %v1636 = vsel %vm1629, %v1635, %v1622
  %vm1637 = vcmask 15360
  %1638 = vst.msk [vmem:[%s9] sm:$0xff] %vm1637, %v1636
  // Predicated region
  $region38: #{sim2net_forward.1} parent=0 // pred_check
    _
  $region39: #{sim2net_forward.1} parent=0 // pred_check_branch
    %1640 = sbr.rel (0) target = $region41
  $region40: #{sim2net_forward.1} parent=0 // pred_region
    _
  $region41: #{sim2net_forward.1} parent=0 // pred_fallthru
    _
  // Predicated region
  $region42: #{sim2net_forward.1} parent=0 // pred_check
    _
  $region43: #{sim2net_forward.1} parent=0 // pred_check_branch
    %1642 = sbr.rel (0) target = $region45
  $region44: #{sim2net_forward.1} parent=0 // pred_region
    _
  $region45: #{sim2net_forward.1} parent=0 // pred_fallthru
    _

</llo_original>
